<compile_context>
chip_gen: v7x
topology: tpu7x:2x2x1
jax: 0.10.0
libtpu: 0.0.40
codegen_flags: <defaults>
</compile_context>

<pallas_src>
import functools

import jax
import jax.numpy as jnp
from jax.experimental import pallas as pl
from jax.experimental.pallas import tpu as pltpu


def _round_up(n, m):
    return ((n + m - 1) // m) * m


def gnn_kernel(H, x_ref, w_enc_ref, w_dec_ref, b_ref, lin_ref, out_ref):
    """One grid step: a feature-major (K_e, Bt) node tile -> (1, Bt) outputs.

    Layout: features/hidden on sublanes, nodes on lanes.  Gate slices are
    sublane-aligned whole-vreg selections; all gate math is lane-dense.
    """
    x = x_ref[...]                                        # (K_e, Bt)

    def split_gates(gates):                               # gates: (4H, Bt)
        i = jax.nn.sigmoid(gates[0 * H:1 * H, :])
        f = jax.nn.sigmoid(gates[1 * H:2 * H, :])
        g = jnp.tanh(gates[2 * H:3 * H, :])
        o = jax.nn.sigmoid(gates[3 * H:4 * H, :])
        return i, f, g, o

    def enc_cell(inp, w, bias):
        # Zero initial (h, c): w_hh @ h == 0 and f * c == 0 -> elided.
        gates = jnp.dot(w, inp.astype(w.dtype),
                        preferred_element_type=jnp.float32) + bias
        i, _, g, o = split_gates(gates)
        c = i * g
        h = o * jnp.tanh(c)
        return h, c

    def dec_cell(inp, h_prev, c_prev, w, bias):
        # Fused matmul: [w_ih^T | w_hh^T] @ [x ; h]; sublane concat is free.
        xh = jnp.concatenate([inp, h_prev], axis=0).astype(w.dtype)
        gates = jnp.dot(w, xh, preferred_element_type=jnp.float32) + bias
        i, f, g, o = split_gates(gates)
        c = f * c_prev + i * g
        h = o * jnp.tanh(c)
        return h

    # Ref-level slices are free views: layers 1/2 only contract over the first
    # H columns (extra pad columns exist only when node_features > H).
    w_e1 = w_enc_ref[1, :, 0:H]
    w_e2 = w_enc_ref[2, :, 0:H]

    # ---- Encoder: 3-layer LSTM, seq_len == 1, zero initial (h, c) ----
    h_e0, c_e0 = enc_cell(x,    w_enc_ref[0], b_ref[:, 0:1])
    h_e1, c_e1 = enc_cell(h_e0, w_e1,         b_ref[:, 1:2])
    h_e2, c_e2 = enc_cell(h_e1, w_e2,         b_ref[:, 2:3])

    # ---- Decoder: 3-layer LSTM, seq_len == 1, seeded with encoder (h_n, c_n) ----
    h_d0 = dec_cell(h_e2, h_e0, c_e0, w_dec_ref[0], b_ref[:, 3:4])
    h_d1 = dec_cell(h_d0, h_e1, c_e1, w_dec_ref[1], b_ref[:, 4:5])
    h_d2 = dec_cell(h_d1, h_e2, c_e2, w_dec_ref[2], b_ref[:, 5:6])

    # ---- Fused final Linear column: out[:, -1] = lin_w[:, -1] . h_d2 + lin_b[-1]
    # Broadcast multiply + sublane reduce instead of an M=1 matmul.
    lin_w = lin_ref[0:H, :]                               # (H, 1)
    lin_b = lin_ref[H:H + 1, :]                           # (1, 1)
    out = jnp.sum(h_d2 * lin_w, axis=0, keepdims=True) + lin_b
    out_ref[...] = out.astype(out_ref.dtype)              # (1, Bt) lane-dense


def init_params(key, F, H, O):
    """Deterministic params mirroring nn.LSTM / nn.Linear shapes (w stored (din, 4H))."""
    k = 1.0 / jnp.sqrt(jnp.float32(H))
    params = {}
    keys = jax.random.split(key, 6 * 4 + 2)
    ki = 0
    layer_in = [F, H, H, H, H, H]                 # enc0, enc1, enc2, dec0, dec1, dec2
    names = ["e0", "e1", "e2", "d0", "d1", "d2"]
    for name, din in zip(names, layer_in):
        w_ih = jax.random.uniform(keys[ki], (din, 4 * H), jnp.float32, -k, k); ki += 1
        w_hh = jax.random.uniform(keys[ki], (H, 4 * H), jnp.float32, -k, k);   ki += 1
        b_ih = jax.random.uniform(keys[ki], (1, 4 * H), jnp.float32, -k, k);   ki += 1
        b_hh = jax.random.uniform(keys[ki], (1, 4 * H), jnp.float32, -k, k);   ki += 1
        params[name] = (w_ih, w_hh, b_ih + b_hh)  # fold the two biases together
    kl = 1.0 / jnp.sqrt(jnp.float32(H))
    params["lin_w"] = jax.random.uniform(keys[ki], (H, O), jnp.float32, -kl, kl); ki += 1
    params["lin_b"] = jax.random.uniform(keys[ki], (1, O), jnp.float32, -kl, kl)
    return params


def pack_params(params, F, H, O, dtype=jnp.float32):
    """Pack per-layer params into feature-major kernel slabs.

    `dtype` applies to the matmul operand slabs (w_enc, w_dec); use
    jnp.bfloat16 on v6e/v7x for extra MXU/DMA throughput.  Biases and the
    Linear column stay f32 (added after the f32-accumulated matmul).
    """
    K_e = max(F, H)

    def pad_cols(wt):
        return jnp.pad(wt, ((0, 0), (0, K_e - wt.shape[1])))

    # Encoder: only w_ih is live (initial h is zero); transpose to (4H, din),
    # pad the contraction (column) axis up to K_e with zeros.
    w_enc = jnp.stack([pad_cols(params[n][0].T)
                       for n in ("e0", "e1", "e2")]).astype(dtype)        # (3, 4H, K_e)
    # Decoder: fuse [w_ih^T | w_hh^T] along the contraction (column) axis.
    w_dec = jnp.stack([jnp.concatenate([params[n][0].T, params[n][1].T], axis=1)
                       for n in ("d0", "d1", "d2")]).astype(dtype)        # (3, 4H, 2H)
    # Folded biases as columns: e0,e1,e2,d0,d1,d2.
    b_all = jnp.concatenate([params[n][2].T
                             for n in ("e0", "e1", "e2", "d0", "d1", "d2")],
                            axis=1).astype(jnp.float32)                   # (4H, 6)
    # Only the last Linear column is ever used (GNN returns x[:, -1]); append its bias.
    lin = jnp.concatenate([params["lin_w"][:, O - 1:O],
                           params["lin_b"][:, O - 1:O]],
                          axis=0).astype(jnp.float32)                     # (H+1, 1)
    return {"w_enc": w_enc, "w_dec": w_dec, "b_all": b_all, "lin": lin}


def gnn_forward(x, edge_index, edge_attr, packed, F, H, block_b=None):
    """GNN.forward: encoder->decoder stacked LSTM over one step, returns x[:, -1]."""
    del edge_index, edge_attr                 # graph structure unused, as in the reference
    # TODO(synk): for tiny node counts (B << 128) dispatch to a plain XLA path;
    # the pallas_call launch + DMAs dwarf the ~100 KFLOP of compute there.
    B = x.shape[0]
    K_e = max(F, H)

    w_enc, w_dec = packed["w_enc"], packed["w_dec"]
    b_all, lin = packed["b_all"], packed["lin"]

    if block_b is None:
        # Node (lane) tile: multiple of 128, large enough to amortize the
        # ~0.35 us per-grid-step overhead, but capped so the grid has >= 2
        # steps once B is big (v7x has 2 TensorCores sharing the "parallel"
        # node axis).  Sweep 512-2048 for very large node counts.
        block_b = max(128, min(1024, _round_up(pl.cdiv(B, 2), 128)))
    B_pad = _round_up(B, block_b)

    # Feature-major layout: nodes on lanes, features/hidden on sublanes.
    # Pad features up to K_e (matching weight columns are zero) and nodes up
    # to a whole number of blocks (extra lanes compute garbage, sliced off).
    x_t = jnp.pad(x.T.astype(w_enc.dtype), ((0, K_e - F), (0, B_pad - B)))

    out = pl.pallas_call(
        functools.partial(gnn_kernel, H),
        out_shape=jax.ShapeDtypeStruct((1, B_pad), jnp.float32),
        grid=(B_pad // block_b,),
        in_specs=[
            pl.BlockSpec((K_e, block_b), lambda i: (0, i)),
            # Weight/bias slabs stay VMEM-resident via constant index_maps.
            # (They are small enough that double-buffering them is harmless;
            #  pl.Buffered(1) would shave a little scoped VMEM if needed.)
            pl.BlockSpec(w_enc.shape, lambda i: (0, 0, 0)),
            pl.BlockSpec(w_dec.shape, lambda i: (0, 0, 0)),
            pl.BlockSpec(b_all.shape, lambda i: (0, 0)),
            pl.BlockSpec(lin.shape, lambda i: (0, 0)),
        ],
        out_specs=pl.BlockSpec((1, block_b), lambda i: (0, i)),
        compiler_params=pltpu.CompilerParams(
            dimension_semantics=("parallel",),
            # Headroom for large block_b sweeps (v5e scoped default is 16 MiB;
            # 32 MiB is safe on every generation incl. v7x).
            vmem_limit_bytes=32 * 1024 * 1024,
        ),
    )(x_t, w_enc, w_dec, b_all, lin)

    return out[0, :B]                          # GNN.forward returns x[:, -1]


def gnn_reference(x, params, H):
    """Pure-JAX reference for correctness checking."""
    def cell(xx, h, c, p):
        w_ih, w_hh, b = p
        g = xx @ w_ih + h @ w_hh + b
        i = jax.nn.sigmoid(g[:, 0:H]); f = jax.nn.sigmoid(g[:, H:2 * H])
        gg = jnp.tanh(g[:, 2 * H:3 * H]); o = jax.nn.sigmoid(g[:, 3 * H:4 * H])
        c2 = f * c + i * gg
        return o * jnp.tanh(c2), c2
    z = jnp.zeros((x.shape[0], H), jnp.float32)
    h0, c0 = cell(x, z, z, params["e0"])
    h1, c1 = cell(h0, z, z, params["e1"])
    h2, c2 = cell(h1, z, z, params["e2"])
    d0, _ = cell(h2, h0, c0, params["d0"])
    d1, _ = cell(d0, h1, c1, params["d1"])
    d2, _ = cell(d1, h2, c2, params["d2"])
    out = d2 @ params["lin_w"] + params["lin_b"]
    return out[:, -1]


if __name__ == "__main__":
    key = jax.random.PRNGKey(0)
    k_x, k_p, k_x2, k_p2 = jax.random.split(key, 4)

    # Unused graph structure (signature parity with the PyTorch module):
    edge_index = jnp.zeros((2, 4), dtype=jnp.int32)
    edge_attr = jnp.zeros((4, 1), dtype=jnp.float32)

    # ---- Test 1: small demo shapes (F <= H), single-block grid ----
    B, F, H, O = 8, 16, 32, 4                # nodes, node_features, hidden, out
    x = jax.random.normal(k_x, (B, F), dtype=jnp.float32)
    params = init_params(k_p, F, H, O)
    packed = pack_params(params, F, H, O)
    y = jax.block_until_ready(gnn_forward(x, edge_index, edge_attr, packed, F, H))
    y_ref = gnn_reference(x, params, H)
    assert y.shape == (B,)
    assert jnp.allclose(y, y_ref, atol=1e-5, rtol=1e-5), float(jnp.max(jnp.abs(y - y_ref)))

    # ---- Test 2: F > H and node count not a multiple of the block
    #      (exercises K_e > H ref-slicing, padding, and the multi-block grid) ----
    B2, F2, H2, O2 = 300, 48, 32, 4
    x2 = jax.random.normal(k_x2, (B2, F2), dtype=jnp.float32)
    params2 = init_params(k_p2, F2, H2, O2)
    packed2 = pack_params(params2, F2, H2, O2)
    y2 = jax.block_until_ready(gnn_forward(x2, edge_index, edge_attr, packed2, F2, H2))
    y2_ref = gnn_reference(x2, params2, H2)
    assert y2.shape == (B2,)
    assert jnp.allclose(y2, y2_ref, atol=1e-4, rtol=1e-4), float(jnp.max(jnp.abs(y2 - y2_ref)))

    print("KERNEL_OK")
</pallas_src>

<mosaic_0001>
module attributes {stable_mosaic.version = 11 : i64} {
  func.func @gnn_kernel(%arg0: i32, %arg1: memref<32x128xf32, #tpu.memory_space<vmem>>, %arg2: memref<3x128x32xf32, #tpu.memory_space<vmem>>, %arg3: memref<3x128x64xf32, #tpu.memory_space<vmem>>, %arg4: memref<128x6xf32, #tpu.memory_space<vmem>>, %arg5: memref<33x1xf32, #tpu.memory_space<vmem>>, %arg6: memref<1x128xf32, #tpu.memory_space<vmem>>) attributes {dimension_semantics = [#tpu.dimension_semantics<parallel>], iteration_bounds = array<i64: 1>, scalar_prefetch = 0 : i64, scratch_operands = 0 : i64, tpu.core_type = #tpu.core_type<tc>, window_params = [{transform_indices = @transform_0, window_bounds = array<i64: 32, 128>}, {pipeline_mode = #tpu.pipeline_mode<synchronous>, transform_indices = @transform_1, window_bounds = array<i64: 3, 128, 32>}, {pipeline_mode = #tpu.pipeline_mode<synchronous>, transform_indices = @transform_2, window_bounds = array<i64: 3, 128, 64>}, {pipeline_mode = #tpu.pipeline_mode<synchronous>, transform_indices = @transform_3, window_bounds = array<i64: 128, 6>}, {pipeline_mode = #tpu.pipeline_mode<synchronous>, transform_indices = @transform_4, window_bounds = array<i64: 33, 1>}, {transform_indices = @transform_5, window_bounds = array<i64: 1, 128>}]} {
    %c0 = arith.constant 0 : index
    %c0_0 = arith.constant 0 : index
    %0 = vector.load %arg1[%c0, %c0_0] : memref<32x128xf32, #tpu.memory_space<vmem>>, vector<32x128xf32>
    %c1 = arith.constant 1 : index
    %c0_1 = arith.constant 0 : index
    %c0_2 = arith.constant 0 : index
    %1 = vector.load %arg2[%c1, %c0_1, %c0_2] : memref<3x128x32xf32, #tpu.memory_space<vmem>>, vector<1x128x32xf32>
    %2 = vector.shape_cast %1 : vector<1x128x32xf32> to vector<128x32xf32>
    %c2 = arith.constant 2 : index
    %c0_3 = arith.constant 0 : index
    %c0_4 = arith.constant 0 : index
    %3 = vector.load %arg2[%c2, %c0_3, %c0_4] : memref<3x128x32xf32, #tpu.memory_space<vmem>>, vector<1x128x32xf32>
    %4 = vector.shape_cast %3 : vector<1x128x32xf32> to vector<128x32xf32>
    %c0_5 = arith.constant 0 : index
    %c0_6 = arith.constant 0 : index
    %c0_7 = arith.constant 0 : index
    %5 = vector.load %arg2[%c0_5, %c0_6, %c0_7] : memref<3x128x32xf32, #tpu.memory_space<vmem>>, vector<1x128x32xf32>
    %6 = vector.shape_cast %5 : vector<1x128x32xf32> to vector<128x32xf32>
    %c0_8 = arith.constant 0 : index
    %c0_9 = arith.constant 0 : index
    %7 = vector.load %arg4[%c0_8, %c0_9] : memref<128x6xf32, #tpu.memory_space<vmem>>, vector<128x1xf32>
    %cst = arith.constant dense<0.000000e+00> : vector<128x128xf32>
    %8 = tpu.matmul %6, %0, %cst {dimension_numbers = #tpu.dot_dimension_numbers<[1], [0], [0], [1], [0, 0, 1, 1], [], []>} : vector<128x32xf32>, vector<32x128xf32>, vector<128x128xf32> -> vector<128x128xf32>
    %9 = vector.broadcast %7 : vector<128x1xf32> to vector<128x128xf32>
    %10 = arith.addf %8, %9 : vector<128x128xf32>
    %11 = vector.extract_strided_slice %10 {offsets = [0, 0], sizes = [32, 128], strides = [1, 1]} : vector<128x128xf32> to vector<32x128xf32>
    %12 = arith.negf %11 : vector<32x128xf32>
    %13 = math.exp %12 : vector<32x128xf32>
    %cst_10 = arith.constant 1.000000e+00 : f32
    %14 = vector.broadcast %cst_10 : f32 to vector<32x128xf32>
    %15 = arith.addf %14, %13 : vector<32x128xf32>
    %16 = arith.divf %14, %15 : vector<32x128xf32>
    %17 = vector.extract_strided_slice %10 {offsets = [64, 0], sizes = [32, 128], strides = [1, 1]} : vector<128x128xf32> to vector<32x128xf32>
    %18 = math.tanh %17 : vector<32x128xf32>
    %19 = vector.extract_strided_slice %10 {offsets = [96, 0], sizes = [32, 128], strides = [1, 1]} : vector<128x128xf32> to vector<32x128xf32>
    %20 = arith.negf %19 : vector<32x128xf32>
    %21 = math.exp %20 : vector<32x128xf32>
    %cst_11 = arith.constant 1.000000e+00 : f32
    %22 = vector.broadcast %cst_11 : f32 to vector<32x128xf32>
    %23 = arith.addf %22, %21 : vector<32x128xf32>
    %24 = arith.divf %22, %23 : vector<32x128xf32>
    %25 = arith.mulf %16, %18 : vector<32x128xf32>
    %26 = math.tanh %25 : vector<32x128xf32>
    %27 = arith.mulf %24, %26 : vector<32x128xf32>
    %c0_12 = arith.constant 0 : index
    %c1_13 = arith.constant 1 : index
    %28 = vector.load %arg4[%c0_12, %c1_13] : memref<128x6xf32, #tpu.memory_space<vmem>>, vector<128x1xf32>
    %cst_14 = arith.constant dense<0.000000e+00> : vector<128x128xf32>
    %29 = tpu.matmul %2, %27, %cst_14 {dimension_numbers = #tpu.dot_dimension_numbers<[1], [0], [0], [1], [0, 0, 1, 1], [], []>} : vector<128x32xf32>, vector<32x128xf32>, vector<128x128xf32> -> vector<128x128xf32>
    %30 = vector.broadcast %28 : vector<128x1xf32> to vector<128x128xf32>
    %31 = arith.addf %29, %30 : vector<128x128xf32>
    %32 = vector.extract_strided_slice %31 {offsets = [0, 0], sizes = [32, 128], strides = [1, 1]} : vector<128x128xf32> to vector<32x128xf32>
    %33 = arith.negf %32 : vector<32x128xf32>
    %34 = math.exp %33 : vector<32x128xf32>
    %cst_15 = arith.constant 1.000000e+00 : f32
    %35 = vector.broadcast %cst_15 : f32 to vector<32x128xf32>
    %36 = arith.addf %35, %34 : vector<32x128xf32>
    %37 = arith.divf %35, %36 : vector<32x128xf32>
    %38 = vector.extract_strided_slice %31 {offsets = [64, 0], sizes = [32, 128], strides = [1, 1]} : vector<128x128xf32> to vector<32x128xf32>
    %39 = math.tanh %38 : vector<32x128xf32>
    %40 = vector.extract_strided_slice %31 {offsets = [96, 0], sizes = [32, 128], strides = [1, 1]} : vector<128x128xf32> to vector<32x128xf32>
    %41 = arith.negf %40 : vector<32x128xf32>
    %42 = math.exp %41 : vector<32x128xf32>
    %cst_16 = arith.constant 1.000000e+00 : f32
    %43 = vector.broadcast %cst_16 : f32 to vector<32x128xf32>
    %44 = arith.addf %43, %42 : vector<32x128xf32>
    %45 = arith.divf %43, %44 : vector<32x128xf32>
    %46 = arith.mulf %37, %39 : vector<32x128xf32>
    %47 = math.tanh %46 : vector<32x128xf32>
    %48 = arith.mulf %45, %47 : vector<32x128xf32>
    %c0_17 = arith.constant 0 : index
    %c2_18 = arith.constant 2 : index
    %49 = vector.load %arg4[%c0_17, %c2_18] : memref<128x6xf32, #tpu.memory_space<vmem>>, vector<128x1xf32>
    %cst_19 = arith.constant dense<0.000000e+00> : vector<128x128xf32>
    %50 = tpu.matmul %4, %48, %cst_19 {dimension_numbers = #tpu.dot_dimension_numbers<[1], [0], [0], [1], [0, 0, 1, 1], [], []>} : vector<128x32xf32>, vector<32x128xf32>, vector<128x128xf32> -> vector<128x128xf32>
    %51 = vector.broadcast %49 : vector<128x1xf32> to vector<128x128xf32>
    %52 = arith.addf %50, %51 : vector<128x128xf32>
    %53 = vector.extract_strided_slice %52 {offsets = [0, 0], sizes = [32, 128], strides = [1, 1]} : vector<128x128xf32> to vector<32x128xf32>
    %54 = arith.negf %53 : vector<32x128xf32>
    %55 = math.exp %54 : vector<32x128xf32>
    %cst_20 = arith.constant 1.000000e+00 : f32
    %56 = vector.broadcast %cst_20 : f32 to vector<32x128xf32>
    %57 = arith.addf %56, %55 : vector<32x128xf32>
    %58 = arith.divf %56, %57 : vector<32x128xf32>
    %59 = vector.extract_strided_slice %52 {offsets = [64, 0], sizes = [32, 128], strides = [1, 1]} : vector<128x128xf32> to vector<32x128xf32>
    %60 = math.tanh %59 : vector<32x128xf32>
    %61 = vector.extract_strided_slice %52 {offsets = [96, 0], sizes = [32, 128], strides = [1, 1]} : vector<128x128xf32> to vector<32x128xf32>
    %62 = arith.negf %61 : vector<32x128xf32>
    %63 = math.exp %62 : vector<32x128xf32>
    %cst_21 = arith.constant 1.000000e+00 : f32
    %64 = vector.broadcast %cst_21 : f32 to vector<32x128xf32>
    %65 = arith.addf %64, %63 : vector<32x128xf32>
    %66 = arith.divf %64, %65 : vector<32x128xf32>
    %67 = arith.mulf %58, %60 : vector<32x128xf32>
    %68 = math.tanh %67 : vector<32x128xf32>
    %69 = arith.mulf %66, %68 : vector<32x128xf32>
    %c0_22 = arith.constant 0 : index
    %c0_23 = arith.constant 0 : index
    %c0_24 = arith.constant 0 : index
    %70 = vector.load %arg3[%c0_22, %c0_23, %c0_24] : memref<3x128x64xf32, #tpu.memory_space<vmem>>, vector<1x128x64xf32>
    %71 = vector.shape_cast %70 : vector<1x128x64xf32> to vector<128x64xf32>
    %c0_25 = arith.constant 0 : index
    %c3 = arith.constant 3 : index
    %72 = vector.load %arg4[%c0_25, %c3] : memref<128x6xf32, #tpu.memory_space<vmem>>, vector<128x1xf32>
    %73 = tpu.concatenate %69, %27 in 0 : vector<32x128xf32>, vector<32x128xf32> -> vector<64x128xf32>
    %cst_26 = arith.constant dense<0.000000e+00> : vector<128x128xf32>
    %74 = tpu.matmul %71, %73, %cst_26 {dimension_numbers = #tpu.dot_dimension_numbers<[1], [0], [0], [1], [0, 0, 1, 1], [], []>} : vector<128x64xf32>, vector<64x128xf32>, vector<128x128xf32> -> vector<128x128xf32>
    %75 = vector.broadcast %72 : vector<128x1xf32> to vector<128x128xf32>
    %76 = arith.addf %74, %75 : vector<128x128xf32>
    %77 = vector.extract_strided_slice %76 {offsets = [0, 0], sizes = [32, 128], strides = [1, 1]} : vector<128x128xf32> to vector<32x128xf32>
    %78 = arith.negf %77 : vector<32x128xf32>
    %79 = math.exp %78 : vector<32x128xf32>
    %cst_27 = arith.constant 1.000000e+00 : f32
    %80 = vector.broadcast %cst_27 : f32 to vector<32x128xf32>
    %81 = arith.addf %80, %79 : vector<32x128xf32>
    %82 = arith.divf %80, %81 : vector<32x128xf32>
    %83 = vector.extract_strided_slice %76 {offsets = [32, 0], sizes = [32, 128], strides = [1, 1]} : vector<128x128xf32> to vector<32x128xf32>
    %84 = arith.negf %83 : vector<32x128xf32>
    %85 = math.exp %84 : vector<32x128xf32>
    %cst_28 = arith.constant 1.000000e+00 : f32
    %86 = vector.broadcast %cst_28 : f32 to vector<32x128xf32>
    %87 = arith.addf %86, %85 : vector<32x128xf32>
    %88 = arith.divf %86, %87 : vector<32x128xf32>
    %89 = vector.extract_strided_slice %76 {offsets = [64, 0], sizes = [32, 128], strides = [1, 1]} : vector<128x128xf32> to vector<32x128xf32>
    %90 = math.tanh %89 : vector<32x128xf32>
    %91 = vector.extract_strided_slice %76 {offsets = [96, 0], sizes = [32, 128], strides = [1, 1]} : vector<128x128xf32> to vector<32x128xf32>
    %92 = arith.negf %91 : vector<32x128xf32>
    %93 = math.exp %92 : vector<32x128xf32>
    %cst_29 = arith.constant 1.000000e+00 : f32
    %94 = vector.broadcast %cst_29 : f32 to vector<32x128xf32>
    %95 = arith.addf %94, %93 : vector<32x128xf32>
    %96 = arith.divf %94, %95 : vector<32x128xf32>
    %97 = arith.mulf %88, %25 : vector<32x128xf32>
    %98 = arith.mulf %82, %90 : vector<32x128xf32>
    %99 = arith.addf %97, %98 : vector<32x128xf32>
    %100 = math.tanh %99 : vector<32x128xf32>
    %101 = arith.mulf %96, %100 : vector<32x128xf32>
    %c1_30 = arith.constant 1 : index
    %c0_31 = arith.constant 0 : index
    %c0_32 = arith.constant 0 : index
    %102 = vector.load %arg3[%c1_30, %c0_31, %c0_32] : memref<3x128x64xf32, #tpu.memory_space<vmem>>, vector<1x128x64xf32>
    %103 = vector.shape_cast %102 : vector<1x128x64xf32> to vector<128x64xf32>
    %c0_33 = arith.constant 0 : index
    %c4 = arith.constant 4 : index
    %104 = vector.load %arg4[%c0_33, %c4] : memref<128x6xf32, #tpu.memory_space<vmem>>, vector<128x1xf32>
    %105 = tpu.concatenate %101, %48 in 0 : vector<32x128xf32>, vector<32x128xf32> -> vector<64x128xf32>
    %cst_34 = arith.constant dense<0.000000e+00> : vector<128x128xf32>
    %106 = tpu.matmul %103, %105, %cst_34 {dimension_numbers = #tpu.dot_dimension_numbers<[1], [0], [0], [1], [0, 0, 1, 1], [], []>} : vector<128x64xf32>, vector<64x128xf32>, vector<128x128xf32> -> vector<128x128xf32>
    %107 = vector.broadcast %104 : vector<128x1xf32> to vector<128x128xf32>
    %108 = arith.addf %106, %107 : vector<128x128xf32>
    %109 = vector.extract_strided_slice %108 {offsets = [0, 0], sizes = [32, 128], strides = [1, 1]} : vector<128x128xf32> to vector<32x128xf32>
    %110 = arith.negf %109 : vector<32x128xf32>
    %111 = math.exp %110 : vector<32x128xf32>
    %cst_35 = arith.constant 1.000000e+00 : f32
    %112 = vector.broadcast %cst_35 : f32 to vector<32x128xf32>
    %113 = arith.addf %112, %111 : vector<32x128xf32>
    %114 = arith.divf %112, %113 : vector<32x128xf32>
    %115 = vector.extract_strided_slice %108 {offsets = [32, 0], sizes = [32, 128], strides = [1, 1]} : vector<128x128xf32> to vector<32x128xf32>
    %116 = arith.negf %115 : vector<32x128xf32>
    %117 = math.exp %116 : vector<32x128xf32>
    %cst_36 = arith.constant 1.000000e+00 : f32
    %118 = vector.broadcast %cst_36 : f32 to vector<32x128xf32>
    %119 = arith.addf %118, %117 : vector<32x128xf32>
    %120 = arith.divf %118, %119 : vector<32x128xf32>
    %121 = vector.extract_strided_slice %108 {offsets = [64, 0], sizes = [32, 128], strides = [1, 1]} : vector<128x128xf32> to vector<32x128xf32>
    %122 = math.tanh %121 : vector<32x128xf32>
    %123 = vector.extract_strided_slice %108 {offsets = [96, 0], sizes = [32, 128], strides = [1, 1]} : vector<128x128xf32> to vector<32x128xf32>
    %124 = arith.negf %123 : vector<32x128xf32>
    %125 = math.exp %124 : vector<32x128xf32>
    %cst_37 = arith.constant 1.000000e+00 : f32
    %126 = vector.broadcast %cst_37 : f32 to vector<32x128xf32>
    %127 = arith.addf %126, %125 : vector<32x128xf32>
    %128 = arith.divf %126, %127 : vector<32x128xf32>
    %129 = arith.mulf %120, %46 : vector<32x128xf32>
    %130 = arith.mulf %114, %122 : vector<32x128xf32>
    %131 = arith.addf %129, %130 : vector<32x128xf32>
    %132 = math.tanh %131 : vector<32x128xf32>
    %133 = arith.mulf %128, %132 : vector<32x128xf32>
    %c2_38 = arith.constant 2 : index
    %c0_39 = arith.constant 0 : index
    %c0_40 = arith.constant 0 : index
    %134 = vector.load %arg3[%c2_38, %c0_39, %c0_40] : memref<3x128x64xf32, #tpu.memory_space<vmem>>, vector<1x128x64xf32>
    %135 = vector.shape_cast %134 : vector<1x128x64xf32> to vector<128x64xf32>
    %c0_41 = arith.constant 0 : index
    %c5 = arith.constant 5 : index
    %136 = vector.load %arg4[%c0_41, %c5] : memref<128x6xf32, #tpu.memory_space<vmem>>, vector<128x1xf32>
    %137 = tpu.concatenate %133, %69 in 0 : vector<32x128xf32>, vector<32x128xf32> -> vector<64x128xf32>
    %cst_42 = arith.constant dense<0.000000e+00> : vector<128x128xf32>
    %138 = tpu.matmul %135, %137, %cst_42 {dimension_numbers = #tpu.dot_dimension_numbers<[1], [0], [0], [1], [0, 0, 1, 1], [], []>} : vector<128x64xf32>, vector<64x128xf32>, vector<128x128xf32> -> vector<128x128xf32>
    %139 = vector.broadcast %136 : vector<128x1xf32> to vector<128x128xf32>
    %140 = arith.addf %138, %139 : vector<128x128xf32>
    %141 = vector.extract_strided_slice %140 {offsets = [0, 0], sizes = [32, 128], strides = [1, 1]} : vector<128x128xf32> to vector<32x128xf32>
    %142 = arith.negf %141 : vector<32x128xf32>
    %143 = math.exp %142 : vector<32x128xf32>
    %cst_43 = arith.constant 1.000000e+00 : f32
    %144 = vector.broadcast %cst_43 : f32 to vector<32x128xf32>
    %145 = arith.addf %144, %143 : vector<32x128xf32>
    %146 = arith.divf %144, %145 : vector<32x128xf32>
    %147 = vector.extract_strided_slice %140 {offsets = [32, 0], sizes = [32, 128], strides = [1, 1]} : vector<128x128xf32> to vector<32x128xf32>
    %148 = arith.negf %147 : vector<32x128xf32>
    %149 = math.exp %148 : vector<32x128xf32>
    %cst_44 = arith.constant 1.000000e+00 : f32
    %150 = vector.broadcast %cst_44 : f32 to vector<32x128xf32>
    %151 = arith.addf %150, %149 : vector<32x128xf32>
    %152 = arith.divf %150, %151 : vector<32x128xf32>
    %153 = vector.extract_strided_slice %140 {offsets = [64, 0], sizes = [32, 128], strides = [1, 1]} : vector<128x128xf32> to vector<32x128xf32>
    %154 = math.tanh %153 : vector<32x128xf32>
    %155 = vector.extract_strided_slice %140 {offsets = [96, 0], sizes = [32, 128], strides = [1, 1]} : vector<128x128xf32> to vector<32x128xf32>
    %156 = arith.negf %155 : vector<32x128xf32>
    %157 = math.exp %156 : vector<32x128xf32>
    %cst_45 = arith.constant 1.000000e+00 : f32
    %158 = vector.broadcast %cst_45 : f32 to vector<32x128xf32>
    %159 = arith.addf %158, %157 : vector<32x128xf32>
    %160 = arith.divf %158, %159 : vector<32x128xf32>
    %161 = arith.mulf %152, %67 : vector<32x128xf32>
    %162 = arith.mulf %146, %154 : vector<32x128xf32>
    %163 = arith.addf %161, %162 : vector<32x128xf32>
    %164 = math.tanh %163 : vector<32x128xf32>
    %165 = arith.mulf %160, %164 : vector<32x128xf32>
    %c0_46 = arith.constant 0 : index
    %c0_47 = arith.constant 0 : index
    %166 = vector.load %arg5[%c0_46, %c0_47] : memref<33x1xf32, #tpu.memory_space<vmem>>, vector<32x1xf32>
    %c32 = arith.constant 32 : index
    %c0_48 = arith.constant 0 : index
    %167 = vector.load %arg5[%c32, %c0_48] : memref<33x1xf32, #tpu.memory_space<vmem>>, vector<1x1xf32>
    %168 = vector.broadcast %166 : vector<32x1xf32> to vector<32x128xf32>
    %169 = arith.mulf %165, %168 : vector<32x128xf32>
    %cst_49 = arith.constant dense<0.000000e+00> : vector<128xf32>
    %170 = vector.multi_reduction <add>, %169, %cst_49 [0] : vector<32x128xf32> to vector<128xf32>
    %171 = vector.shape_cast %170 : vector<128xf32> to vector<1x128xf32>
    %172 = vector.broadcast %167 : vector<1x1xf32> to vector<1x128xf32>
    %173 = arith.addf %171, %172 : vector<1x128xf32>
    %c0_50 = arith.constant 0 : index
    %c0_51 = arith.constant 0 : index
    %174 = vector.load %arg6[%c0_50, %c0_51] : memref<1x128xf32, #tpu.memory_space<vmem>>, vector<1x128xf32>
    tpu.vector_store %arg6[%c0_50, %c0_51], %173 {strides = array<i32>} : memref<1x128xf32, #tpu.memory_space<vmem>>, vector<1x128xf32>,
    return
  }
  func.func @transform_0(%arg0: i32) -> (i32, i32) {
    %c0_i32 = arith.constant 0 : i32
    %c0_i32_0 = arith.constant 0 : i32
    return %c0_i32, %arg0 : i32, i32
  }
  func.func @transform_1(%arg0: i32) -> (i32, i32, i32) {
    %c0_i32 = arith.constant 0 : i32
    %c0_i32_0 = arith.constant 0 : i32
    %c0_i32_1 = arith.constant 0 : i32
    %c0_i32_2 = arith.constant 0 : i32
    return %c0_i32, %c0_i32_0, %c0_i32_1 : i32, i32, i32
  }
  func.func @transform_2(%arg0: i32) -> (i32, i32, i32) {
    %c0_i32 = arith.constant 0 : i32
    %c0_i32_0 = arith.constant 0 : i32
    %c0_i32_1 = arith.constant 0 : i32
    %c0_i32_2 = arith.constant 0 : i32
    return %c0_i32, %c0_i32_0, %c0_i32_1 : i32, i32, i32
  }
  func.func @transform_3(%arg0: i32) -> (i32, i32) {
    %c0_i32 = arith.constant 0 : i32
    %c0_i32_0 = arith.constant 0 : i32
    %c0_i32_1 = arith.constant 0 : i32
    return %c0_i32, %c0_i32_0 : i32, i32
  }
  func.func @transform_4(%arg0: i32) -> (i32, i32) {
    %c0_i32 = arith.constant 0 : i32
    %c0_i32_0 = arith.constant 0 : i32
    %c0_i32_1 = arith.constant 0 : i32
    return %c0_i32, %c0_i32_0 : i32, i32
  }
  func.func @transform_5(%arg0: i32) -> (i32, i32) {
    %c0_i32 = arith.constant 0 : i32
    %c0_i32_0 = arith.constant 0 : i32
    return %c0_i32, %arg0 : i32, i32
  }
}

</mosaic_0001>

<llo_original>
// kernel: tpu_custom_call.1
$region0: #{tpu_custom_call.1}
  #allocation0 [shape = 'u32[]', space=smem, size = 0x4, offset = 0x4, fixed_abs, tag = 'smem constant byte address 0x4 - core index']
  #allocation1 [shape = 'u32[144,128]{1,0:T(1,128)}', space=vmem, size = 0x12000, scoped, tag = 'internal scratch']
  %s0 = inlined_call_operand.vmem [shape: f32[32,128], index: 0, kind: input, shape index: {}]
  %s1 = inlined_call_operand.vmem [shape: f32[3,128,32], index: 1, kind: input, shape index: {}]
  %s2 = inlined_call_operand.vmem [shape: f32[3,128,64], index: 2, kind: input, shape index: {}]
  %s3 = inlined_call_operand.vmem [shape: f32[128,6], index: 3, kind: input, shape index: {}]
  %s4 = inlined_call_operand.vmem [shape: f32[33,1], index: 4, kind: input, shape index: {}]
  %s5 = inlined_call_operand.hbm [shape: f32[1,128], index: 5, kind: output, shape index: {}]
  %s6 = sld [smem:[#allocation0]]
  $region30: #{tpu_custom_call.1} parent=0
    _
  %s8 = ssub.s32 1, %s6
  %s9 = scalar_select 0, %s8, %s6
  $region1: #{tpu_custom_call.1} parent=0
    #allocation2 [shape = 'u8[512]{0}', space=vmem, size = 0x400, scoped, tag = 'output window, operand 0, single buffered']
    #allocation3 [shape = 's32[1]{0}', space=sflag, size = 0x4, scoped, tag = 'scoped memory for tpu_custom_call.1']
    %10 = vsyncpa [#allocation3], 0
    // Predicated region
    $region2: #{tpu_custom_call.1} parent=1 // pred_check
      _
    $region3: #{tpu_custom_call.1} parent=1 // pred_check_branch
      %12 = sbr.rel (0) target = $region5
    $region4: #{tpu_custom_call.1} parent=1 // pred_region
      _
    $region5: #{tpu_custom_call.1} parent=1 // pred_fallthru
      _
    // Predicated region
    $region6: #{tpu_custom_call.1} parent=1 // pred_check
      _
    $region7: #{tpu_custom_call.1} parent=1 // pred_check_branch
      %14 = sbr.rel (0) target = $region9
    $region8: #{tpu_custom_call.1} parent=1 // pred_region
      _
    $region9: #{tpu_custom_call.1} parent=1 // pred_fallthru
      _
    // Predicated region
    $region10: #{tpu_custom_call.1} parent=1 // pred_check
      _
    $region11: #{tpu_custom_call.1} parent=1 // pred_check_branch
      %16 = sbr.rel (0) target = $region13
    $region12: #{tpu_custom_call.1} parent=1 // pred_region
      _
    $region13: #{tpu_custom_call.1} parent=1 // pred_fallthru
      _
    // Predicated region
    $region14: #{tpu_custom_call.1} parent=1 // pred_check
      _
    $region15: #{tpu_custom_call.1} parent=1 // pred_check_branch
      %18 = sbr.rel (0) target = $region17
    $region16: #{tpu_custom_call.1} parent=1 // pred_region
      _
    $region17: #{tpu_custom_call.1} parent=1 // pred_fallthru
      _
    // Predicated region
    $region18: #{tpu_custom_call.1} parent=1 // pred_check
      _
    $region19: #{tpu_custom_call.1} parent=1 // pred_check_branch
      %20 = sbr.rel (0) target = $region21
    $region20: #{tpu_custom_call.1} parent=1 // pred_region
      _
    $region21: #{tpu_custom_call.1} parent=1 // pred_fallthru
      _
    %v21 = vld [vmem:[%s0] sm:$0xff]
    %v22 = vld [vmem:[%s0 + $0x8] sm:$0xff]
    %v23 = vld [vmem:[%s0 + $0x10] sm:$0xff]
    %v24 = vld [vmem:[%s0 + $0x18] sm:$0xff]
    %s25 = scalar_lea.vmem %s1, 128
    %v26 = vld [vmem:[%s25] sm:$0xff]
    %v27 = vld [vmem:[%s25 + $0x8] sm:$0xff]
    %v28 = vld [vmem:[%s25 + $0x10] sm:$0xff]
    %v29 = vld [vmem:[%s25 + $0x18] sm:$0xff]
    %v30 = vld [vmem:[%s25 + $0x20] sm:$0xff]
    %v31 = vld [vmem:[%s25 + $0x28] sm:$0xff]
    %v32 = vld [vmem:[%s25 + $0x30] sm:$0xff]
    %v33 = vld [vmem:[%s25 + $0x38] sm:$0xff]
    %v34 = vld [vmem:[%s25 + $0x40] sm:$0xff]
    %v35 = vld [vmem:[%s25 + $0x48] sm:$0xff]
    %v36 = vld [vmem:[%s25 + $0x50] sm:$0xff]
    %v37 = vld [vmem:[%s25 + $0x58] sm:$0xff]
    %v38 = vld [vmem:[%s25 + $0x60] sm:$0xff]
    %v39 = vld [vmem:[%s25 + $0x68] sm:$0xff]
    %v40 = vld [vmem:[%s25 + $0x70] sm:$0xff]
    %v41 = vld [vmem:[%s25 + $0x78] sm:$0xff]
    %s42 = scalar_lea.vmem %s1, 256
    %v43 = vld [vmem:[%s42] sm:$0xff]
    %v44 = vld [vmem:[%s42 + $0x8] sm:$0xff]
    %v45 = vld [vmem:[%s42 + $0x10] sm:$0xff]
    %v46 = vld [vmem:[%s42 + $0x18] sm:$0xff]
    %v47 = vld [vmem:[%s42 + $0x20] sm:$0xff]
    %v48 = vld [vmem:[%s42 + $0x28] sm:$0xff]
    %v49 = vld [vmem:[%s42 + $0x30] sm:$0xff]
    %v50 = vld [vmem:[%s42 + $0x38] sm:$0xff]
    %v51 = vld [vmem:[%s42 + $0x40] sm:$0xff]
    %v52 = vld [vmem:[%s42 + $0x48] sm:$0xff]
    %v53 = vld [vmem:[%s42 + $0x50] sm:$0xff]
    %v54 = vld [vmem:[%s42 + $0x58] sm:$0xff]
    %v55 = vld [vmem:[%s42 + $0x60] sm:$0xff]
    %v56 = vld [vmem:[%s42 + $0x68] sm:$0xff]
    %v57 = vld [vmem:[%s42 + $0x70] sm:$0xff]
    %v58 = vld [vmem:[%s42 + $0x78] sm:$0xff]
    %v59 = vld [vmem:[%s1] sm:$0xff]
    %v60 = vld [vmem:[%s1 + $0x8] sm:$0xff]
    %v61 = vld [vmem:[%s1 + $0x10] sm:$0xff]
    %v62 = vld [vmem:[%s1 + $0x18] sm:$0xff]
    %v63 = vld [vmem:[%s1 + $0x20] sm:$0xff]
    %v64 = vld [vmem:[%s1 + $0x28] sm:$0xff]
    %v65 = vld [vmem:[%s1 + $0x30] sm:$0xff]
    %v66 = vld [vmem:[%s1 + $0x38] sm:$0xff]
    %v67 = vld [vmem:[%s1 + $0x40] sm:$0xff]
    %v68 = vld [vmem:[%s1 + $0x48] sm:$0xff]
    %v69 = vld [vmem:[%s1 + $0x50] sm:$0xff]
    %v70 = vld [vmem:[%s1 + $0x58] sm:$0xff]
    %v71 = vld [vmem:[%s1 + $0x60] sm:$0xff]
    %v72 = vld [vmem:[%s1 + $0x68] sm:$0xff]
    %v73 = vld [vmem:[%s1 + $0x70] sm:$0xff]
    %v74 = vld [vmem:[%s1 + $0x78] sm:$0xff]
    %v75 = vld [vmem:[%s3] sm:$0xff]
    %v76 = vld [vmem:[%s3 + $0x8] sm:$0xff]
    %v77 = vld [vmem:[%s3 + $0x10] sm:$0xff]
    %v78 = vld [vmem:[%s3 + $0x18] sm:$0xff]
    %v79 = vld [vmem:[%s3 + $0x20] sm:$0xff]
    %v80 = vld [vmem:[%s3 + $0x28] sm:$0xff]
    %v81 = vld [vmem:[%s3 + $0x30] sm:$0xff]
    %v82 = vld [vmem:[%s3 + $0x38] sm:$0xff]
    %v83 = vld [vmem:[%s3 + $0x40] sm:$0xff]
    %v84 = vld [vmem:[%s3 + $0x48] sm:$0xff]
    %v85 = vld [vmem:[%s3 + $0x50] sm:$0xff]
    %v86 = vld [vmem:[%s3 + $0x58] sm:$0xff]
    %v87 = vld [vmem:[%s3 + $0x60] sm:$0xff]
    %v88 = vld [vmem:[%s3 + $0x68] sm:$0xff]
    %v89 = vld [vmem:[%s3 + $0x70] sm:$0xff]
    %v90 = vld [vmem:[%s3 + $0x78] sm:$0xff]
    %92 = vset.pattern.permute.xlu0 0
    %93 = vperm.xlu0 %92, %v75
    %v94 = vpop.permute.xlu0 %93
    %97 = vset.pattern.permute.xlu0 0
    %98 = vperm.xlu0 %97, %v76
    %v99 = vpop.permute.xlu0 %98
    %102 = vset.pattern.permute.xlu0 0
    %103 = vperm.xlu0 %102, %v77
    %v104 = vpop.permute.xlu0 %103
    %107 = vset.pattern.permute.xlu0 0
    %108 = vperm.xlu0 %107, %v78
    %v109 = vpop.permute.xlu0 %108
    %112 = vset.pattern.permute.xlu0 0
    %113 = vperm.xlu0 %112, %v79
    %v114 = vpop.permute.xlu0 %113
    %116 = vset.pattern.permute.xlu0 0
    %117 = vperm.xlu0 %116, %v80
    %v118 = vpop.permute.xlu0 %117
    %120 = vset.pattern.permute.xlu0 0
    %121 = vperm.xlu0 %120, %v81
    %v122 = vpop.permute.xlu0 %121
    %124 = vset.pattern.permute.xlu0 0
    %125 = vperm.xlu0 %124, %v82
    %v126 = vpop.permute.xlu0 %125
    %128 = vset.pattern.permute.xlu0 0
    %129 = vperm.xlu0 %128, %v83
    %v130 = vpop.permute.xlu0 %129
    %133 = vset.pattern.permute.xlu0 0
    %134 = vperm.xlu0 %133, %v84
    %v135 = vpop.permute.xlu0 %134
    %138 = vset.pattern.permute.xlu0 0
    %139 = vperm.xlu0 %138, %v85
    %v140 = vpop.permute.xlu0 %139
    %143 = vset.pattern.permute.xlu0 0
    %144 = vperm.xlu0 %143, %v86
    %v145 = vpop.permute.xlu0 %144
    %148 = vset.pattern.permute.xlu0 0
    %149 = vperm.xlu0 %148, %v87
    %v150 = vpop.permute.xlu0 %149
    %153 = vset.pattern.permute.xlu0 0
    %154 = vperm.xlu0 %153, %v88
    %v155 = vpop.permute.xlu0 %154
    %158 = vset.pattern.permute.xlu0 0
    %159 = vperm.xlu0 %158, %v89
    %v160 = vpop.permute.xlu0 %159
    %163 = vset.pattern.permute.xlu0 0
    %164 = vperm.xlu0 %163, %v90
    %v165 = vpop.permute.xlu0 %164
    %vm167 = vcmask 261120
    %v169 = vsel %vm167, %v59, 0
    %v172 = vsel %vm167, %v60, 0
    %v175 = vsel %vm167, %v61, 0
    %v178 = vsel %vm167, %v62, 0
    %v181 = vsel %vm167, %v63, 0
    %v184 = vsel %vm167, %v64, 0
    %v187 = vsel %vm167, %v65, 0
    %v190 = vsel %vm167, %v66, 0
    %v193 = vsel %vm167, %v67, 0
    %v196 = vsel %vm167, %v68, 0
    %v199 = vsel %vm167, %v69, 0
    %v202 = vsel %vm167, %v70, 0
    %v205 = vsel %vm167, %v71, 0
    %v208 = vsel %vm167, %v72, 0
    %v211 = vsel %vm167, %v73, 0
    %v214 = vsel %vm167, %v74, 0
    %216 = vmatprep.subr.mxu0 0.0
    %217 = vmatpush1.msra.mxu0 %v21
    %218 = vmatprep.subr.mxu0 0.0
    %219 = vmatpush1.msra.mxu0 %v22
    %220 = vmatprep.subr.mxu0 0.0
    %221 = vmatpush1.msra.mxu0 %v23
    %222 = vmatprep.subr.mxu0 0.0
    %223 = vmatpush1.msra.mxu0 %v24
    %224 = vmatprep.subr.mxu0 0.0
    %225 = vmatpush1.msra.mxu0 0.0
    %226 = vmatprep.subr.mxu0 0.0
    %227 = vmatpush1.msra.mxu0 0.0
    %228 = vmatprep.subr.mxu0 0.0
    %229 = vmatpush1.msra.mxu0 0.0
    %230 = vmatprep.subr.mxu0 0.0
    %231 = vmatpush1.msra.mxu0 0.0
    %232 = vmatprep.subr.mxu0 0.0
    %233 = vmatpush1.msra.mxu0 0.0
    %234 = vmatprep.subr.mxu0 0.0
    %235 = vmatpush1.msra.mxu0 0.0
    %236 = vmatprep.subr.mxu0 0.0
    %237 = vmatpush1.msra.mxu0 0.0
    %238 = vmatprep.subr.mxu0 0.0
    %239 = vmatpush1.msra.mxu0 0.0
    %240 = vmatprep.subr.mxu0 0.0
    %241 = vmatpush1.msra.mxu0 0.0
    %242 = vmatprep.subr.mxu0 0.0
    %243 = vmatpush1.msra.mxu0 0.0
    %244 = vmatprep.subr.mxu0 0.0
    %245 = vmatpush1.msra.mxu0 0.0
    %246 = vmatprep.subr.mxu0 0.0
    %247 = vmatpush1.msra.mxu0 0.0
    %248 = vmatprep.subr.mxu0 0.0
    %249 = vmatpush1.msra.mxu0 0.0
    %250 = vmatprep.subr.mxu0 0.0
    %251 = vmatpush1.msra.mxu0 0.0
    %252 = vmatprep.subr.mxu0 0.0
    %253 = vmatpush1.msra.mxu0 0.0
    %254 = vmatprep.subr.mxu0 0.0
    %255 = vmatpush1.msra.mxu0 0.0
    %256 = vmatprep.subr.mxu0 0.0
    %257 = vmatpush1.msra.mxu0 0.0
    %258 = vmatprep.subr.mxu0 0.0
    %259 = vmatpush1.msra.mxu0 0.0
    %260 = vmatprep.subr.mxu0 0.0
    %261 = vmatpush1.msra.mxu0 0.0
    %262 = vmatprep.subr.mxu0 0.0
    %263 = vmatpush1.msra.mxu0 0.0
    %264 = vmatprep.subr.mxu0 0.0
    %265 = vmatpush1.msra.mxu0 0.0
    %266 = vmatprep.subr.mxu0 0.0
    %267 = vmatpush1.msra.mxu0 0.0
    %268 = vmatprep.subr.mxu0 0.0
    %269 = vmatpush1.msra.mxu0 0.0
    %270 = vmatprep.subr.mxu0 0.0
    %271 = vmatpush1.msra.mxu0 0.0
    %272 = vmatprep.subr.mxu0 0.0
    %273 = vmatpush1.msra.mxu0 0.0
    %274 = vmatprep.subr.mxu0 0.0
    %275 = vmatpush1.msra.mxu0 0.0
    %276 = vmatprep.subr.mxu0 0.0
    %277 = vmatpush1.msra.mxu0 0.0
    %278 = vmatprep.subr.mxu0 0.0
    %279 = vmatpush1.msra.mxu0 0.0
    %280 = vmatprep.mubr.f32.mxu0 0.0
    %281 = vmatmul.mubr.f32.gmra.mrb[0].mxu0 %v169
    %v282 = vpop.f32.mrb[0].mxu0
    %v283 = vadd.f32 %v94, %v282
    %v284 = vpop.f32.mrb[0].mxu0
    %285 = vmatprep.mubr.f32.mxu0 0.0
    %286 = vmatmul.mubr.f32.gmra.mrb[0].mxu0 %v172
    %v287 = vpop.f32.mrb[0].mxu0
    %v288 = vadd.f32 %v99, %v287
    %v289 = vpop.f32.mrb[0].mxu0
    %290 = vmatprep.mubr.f32.mxu0 0.0
    %291 = vmatmul.mubr.f32.gmra.mrb[0].mxu0 %v175
    %v292 = vpop.f32.mrb[0].mxu0
    %v293 = vadd.f32 %v104, %v292
    %v294 = vpop.f32.mrb[0].mxu0
    %295 = vmatprep.mubr.f32.mxu0 0.0
    %296 = vmatmul.mubr.f32.gmra.mrb[0].mxu0 %v178
    %v297 = vpop.f32.mrb[0].mxu0
    %v298 = vadd.f32 %v109, %v297
    %v299 = vpop.f32.mrb[0].mxu0
    %300 = vmatprep.mubr.f32.mxu0 0.0
    %301 = vmatmul.mubr.f32.gmra.mrb[0].mxu0 %v181
    %v302 = vpop.f32.mrb[0].mxu0
    %v303 = vpop.f32.mrb[0].mxu0
    %304 = vmatprep.mubr.f32.mxu0 0.0
    %305 = vmatmul.mubr.f32.gmra.mrb[0].mxu0 %v184
    %v306 = vpop.f32.mrb[0].mxu0
    %v307 = vpop.f32.mrb[0].mxu0
    %308 = vmatprep.mubr.f32.mxu0 0.0
    %309 = vmatmul.mubr.f32.gmra.mrb[0].mxu0 %v187
    %v310 = vpop.f32.mrb[0].mxu0
    %v311 = vpop.f32.mrb[0].mxu0
    %312 = vmatprep.mubr.f32.mxu0 0.0
    %313 = vmatmul.mubr.f32.gmra.mrb[0].mxu0 %v190
    %v314 = vpop.f32.mrb[0].mxu0
    %v315 = vpop.f32.mrb[0].mxu0
    %316 = vmatprep.mubr.f32.mxu0 0.0
    %317 = vmatmul.mubr.f32.gmra.mrb[0].mxu0 %v193
    %v318 = vpop.f32.mrb[0].mxu0
    %v319 = vadd.f32 %v130, %v318
    %v320 = vpop.f32.mrb[0].mxu0
    %321 = vmatprep.mubr.f32.mxu0 0.0
    %322 = vmatmul.mubr.f32.gmra.mrb[0].mxu0 %v196
    %v323 = vpop.f32.mrb[0].mxu0
    %v324 = vadd.f32 %v135, %v323
    %v325 = vpop.f32.mrb[0].mxu0
    %326 = vmatprep.mubr.f32.mxu0 0.0
    %327 = vmatmul.mubr.f32.gmra.mrb[0].mxu0 %v199
    %v328 = vpop.f32.mrb[0].mxu0
    %v329 = vadd.f32 %v140, %v328
    %v330 = vpop.f32.mrb[0].mxu0
    %331 = vmatprep.mubr.f32.mxu0 0.0
    %332 = vmatmul.mubr.f32.gmra.mrb[0].mxu0 %v202
    %v333 = vpop.f32.mrb[0].mxu0
    %v334 = vadd.f32 %v145, %v333
    %v335 = vpop.f32.mrb[0].mxu0
    %336 = vmatprep.mubr.f32.mxu0 0.0
    %337 = vmatmul.mubr.f32.gmra.mrb[0].mxu0 %v205
    %v338 = vpop.f32.mrb[0].mxu0
    %v339 = vadd.f32 %v150, %v338
    %v340 = vpop.f32.mrb[0].mxu0
    %341 = vmatprep.mubr.f32.mxu0 0.0
    %342 = vmatmul.mubr.f32.gmra.mrb[0].mxu0 %v208
    %v343 = vpop.f32.mrb[0].mxu0
    %v344 = vadd.f32 %v155, %v343
    %v345 = vpop.f32.mrb[0].mxu0
    %346 = vmatprep.mubr.f32.mxu0 0.0
    %347 = vmatmul.mubr.f32.gmra.mrb[0].mxu0 %v211
    %v348 = vpop.f32.mrb[0].mxu0
    %v349 = vadd.f32 %v160, %v348
    %v350 = vpop.f32.mrb[0].mxu0
    %351 = vmatprep.mubr.f32.mxu0 0.0
    %352 = vmatmul.mubr.f32.gmra.mrb[0].mxu0 %v214
    %v353 = vpop.f32.mrb[0].mxu0
    %v354 = vadd.f32 %v165, %v353
    %v355 = vpop.f32.mrb[0].mxu0
    %356 = vdwg.mxu0
    %v357 = vxor.u32 %v283, 2147483648
    %v358 = vxor.u32 %v288, 2147483648
    %v359 = vxor.u32 %v293, 2147483648
    %v360 = vxor.u32 %v298, 2147483648
    %v361 = vmul.f32 %v357, 1.442695
    %v362 = vpow.pop %v361
    %v363 = vmul.f32 %v358, 1.442695
    %v364 = vpow.pop %v363
    %v365 = vmul.f32 %v359, 1.442695
    %v366 = vpow.pop %v365
    %v367 = vmul.f32 %v360, 1.442695
    %v368 = vpow.pop %v367
    %v369 = vadd.f32 %v362, 1.0
    %v370 = vadd.f32 %v364, 1.0
    %v371 = vadd.f32 %v366, 1.0
    %v372 = vadd.f32 %v368, 1.0
    %v373 = vrcp.pop %v369
    %v374 = vmul.f32 1.0, %v373
    %v375 = vrcp.pop %v370
    %v376 = vmul.f32 1.0, %v375
    %v377 = vrcp.pop %v371
    %v378 = vmul.f32 1.0, %v377
    %v379 = vrcp.pop %v372
    %v380 = vmul.f32 1.0, %v379
    %v381 = vtanh.pop %v319
    %v382 = vtanh.pop %v324
    %v383 = vtanh.pop %v329
    %v384 = vtanh.pop %v334
    %v385 = vxor.u32 %v339, 2147483648
    %v386 = vxor.u32 %v344, 2147483648
    %v387 = vxor.u32 %v349, 2147483648
    %v388 = vxor.u32 %v354, 2147483648
    %v389 = vmul.f32 %v385, 1.442695
    %v390 = vpow.pop %v389
    %v391 = vmul.f32 %v386, 1.442695
    %v392 = vpow.pop %v391
    %v393 = vmul.f32 %v387, 1.442695
    %v394 = vpow.pop %v393
    %v395 = vmul.f32 %v388, 1.442695
    %v396 = vpow.pop %v395
    %v397 = vadd.f32 %v390, 1.0
    %v398 = vadd.f32 %v392, 1.0
    %v399 = vadd.f32 %v394, 1.0
    %v400 = vadd.f32 %v396, 1.0
    %v401 = vrcp.pop %v397
    %v402 = vmul.f32 1.0, %v401
    %v403 = vrcp.pop %v398
    %v404 = vmul.f32 1.0, %v403
    %v405 = vrcp.pop %v399
    %v406 = vmul.f32 1.0, %v405
    %v407 = vrcp.pop %v400
    %v408 = vmul.f32 1.0, %v407
    %v409 = vmul.f32 %v374, %v381
    %v410 = vmul.f32 %v376, %v382
    %v411 = vmul.f32 %v378, %v383
    %v412 = vmul.f32 %v380, %v384
    %v413 = vtanh.pop %v409
    %v414 = vtanh.pop %v410
    %v415 = vtanh.pop %v411
    %v416 = vtanh.pop %v412
    %v417 = vmul.f32 %v402, %v413
    %v418 = vmul.f32 %v404, %v414
    %v419 = vmul.f32 %v406, %v415
    %v420 = vmul.f32 %v408, %v416
    %421 = vset.pattern.permute.xlu0 1
    %422 = vperm.xlu0 %421, %v75
    %v423 = vpop.permute.xlu0 %422
    %425 = vset.pattern.permute.xlu0 1
    %426 = vperm.xlu0 %425, %v76
    %v427 = vpop.permute.xlu0 %426
    %429 = vset.pattern.permute.xlu0 1
    %430 = vperm.xlu0 %429, %v77
    %v431 = vpop.permute.xlu0 %430
    %433 = vset.pattern.permute.xlu0 1
    %434 = vperm.xlu0 %433, %v78
    %v435 = vpop.permute.xlu0 %434
    %437 = vset.pattern.permute.xlu0 1
    %438 = vperm.xlu0 %437, %v79
    %v439 = vpop.permute.xlu0 %438
    %440 = vset.pattern.permute.xlu0 1
    %441 = vperm.xlu0 %440, %v80
    %v442 = vpop.permute.xlu0 %441
    %443 = vset.pattern.permute.xlu0 1
    %444 = vperm.xlu0 %443, %v81
    %v445 = vpop.permute.xlu0 %444
    %446 = vset.pattern.permute.xlu0 1
    %447 = vperm.xlu0 %446, %v82
    %v448 = vpop.permute.xlu0 %447
    %449 = vset.pattern.permute.xlu0 1
    %450 = vperm.xlu0 %449, %v83
    %v451 = vpop.permute.xlu0 %450
    %453 = vset.pattern.permute.xlu0 1
    %454 = vperm.xlu0 %453, %v84
    %v455 = vpop.permute.xlu0 %454
    %457 = vset.pattern.permute.xlu0 1
    %458 = vperm.xlu0 %457, %v85
    %v459 = vpop.permute.xlu0 %458
    %461 = vset.pattern.permute.xlu0 1
    %462 = vperm.xlu0 %461, %v86
    %v463 = vpop.permute.xlu0 %462
    %465 = vset.pattern.permute.xlu0 1
    %466 = vperm.xlu0 %465, %v87
    %v467 = vpop.permute.xlu0 %466
    %469 = vset.pattern.permute.xlu0 1
    %470 = vperm.xlu0 %469, %v88
    %v471 = vpop.permute.xlu0 %470
    %473 = vset.pattern.permute.xlu0 1
    %474 = vperm.xlu0 %473, %v89
    %v475 = vpop.permute.xlu0 %474
    %477 = vset.pattern.permute.xlu0 1
    %478 = vperm.xlu0 %477, %v90
    %v479 = vpop.permute.xlu0 %478
    %v482 = vsel %vm167, %v26, 0
    %v485 = vsel %vm167, %v27, 0
    %v488 = vsel %vm167, %v28, 0
    %v491 = vsel %vm167, %v29, 0
    %v494 = vsel %vm167, %v30, 0
    %v497 = vsel %vm167, %v31, 0
    %v500 = vsel %vm167, %v32, 0
    %v503 = vsel %vm167, %v33, 0
    %v506 = vsel %vm167, %v34, 0
    %v509 = vsel %vm167, %v35, 0
    %v512 = vsel %vm167, %v36, 0
    %v515 = vsel %vm167, %v37, 0
    %v518 = vsel %vm167, %v38, 0
    %v521 = vsel %vm167, %v39, 0
    %v524 = vsel %vm167, %v40, 0
    %v527 = vsel %vm167, %v41, 0
    %529 = vmatprep.subr.mxu0 0.0
    %530 = vmatpush1.msra.mxu0 %v417
    %531 = vmatprep.subr.mxu0 0.0
    %532 = vmatpush1.msra.mxu0 %v418
    %533 = vmatprep.subr.mxu0 0.0
    %534 = vmatpush1.msra.mxu0 %v419
    %535 = vmatprep.subr.mxu0 0.0
    %536 = vmatpush1.msra.mxu0 %v420
    %537 = vmatprep.subr.mxu0 0.0
    %538 = vmatpush1.msra.mxu0 0.0
    %539 = vmatprep.subr.mxu0 0.0
    %540 = vmatpush1.msra.mxu0 0.0
    %541 = vmatprep.subr.mxu0 0.0
    %542 = vmatpush1.msra.mxu0 0.0
    %543 = vmatprep.subr.mxu0 0.0
    %544 = vmatpush1.msra.mxu0 0.0
    %545 = vmatprep.subr.mxu0 0.0
    %546 = vmatpush1.msra.mxu0 0.0
    %547 = vmatprep.subr.mxu0 0.0
    %548 = vmatpush1.msra.mxu0 0.0
    %549 = vmatprep.subr.mxu0 0.0
    %550 = vmatpush1.msra.mxu0 0.0
    %551 = vmatprep.subr.mxu0 0.0
    %552 = vmatpush1.msra.mxu0 0.0
    %553 = vmatprep.subr.mxu0 0.0
    %554 = vmatpush1.msra.mxu0 0.0
    %555 = vmatprep.subr.mxu0 0.0
    %556 = vmatpush1.msra.mxu0 0.0
    %557 = vmatprep.subr.mxu0 0.0
    %558 = vmatpush1.msra.mxu0 0.0
    %559 = vmatprep.subr.mxu0 0.0
    %560 = vmatpush1.msra.mxu0 0.0
    %561 = vmatprep.subr.mxu0 0.0
    %562 = vmatpush1.msra.mxu0 0.0
    %563 = vmatprep.subr.mxu0 0.0
    %564 = vmatpush1.msra.mxu0 0.0
    %565 = vmatprep.subr.mxu0 0.0
    %566 = vmatpush1.msra.mxu0 0.0
    %567 = vmatprep.subr.mxu0 0.0
    %568 = vmatpush1.msra.mxu0 0.0
    %569 = vmatprep.subr.mxu0 0.0
    %570 = vmatpush1.msra.mxu0 0.0
    %571 = vmatprep.subr.mxu0 0.0
    %572 = vmatpush1.msra.mxu0 0.0
    %573 = vmatprep.subr.mxu0 0.0
    %574 = vmatpush1.msra.mxu0 0.0
    %575 = vmatprep.subr.mxu0 0.0
    %576 = vmatpush1.msra.mxu0 0.0
    %577 = vmatprep.subr.mxu0 0.0
    %578 = vmatpush1.msra.mxu0 0.0
    %579 = vmatprep.subr.mxu0 0.0
    %580 = vmatpush1.msra.mxu0 0.0
    %581 = vmatprep.subr.mxu0 0.0
    %582 = vmatpush1.msra.mxu0 0.0
    %583 = vmatprep.subr.mxu0 0.0
    %584 = vmatpush1.msra.mxu0 0.0
    %585 = vmatprep.subr.mxu0 0.0
    %586 = vmatpush1.msra.mxu0 0.0
    %587 = vmatprep.subr.mxu0 0.0
    %588 = vmatpush1.msra.mxu0 0.0
    %589 = vmatprep.subr.mxu0 0.0
    %590 = vmatpush1.msra.mxu0 0.0
    %591 = vmatprep.subr.mxu0 0.0
    %592 = vmatpush1.msra.mxu0 0.0
    %593 = vmatprep.mubr.f32.mxu0 0.0
    %594 = vmatmul.mubr.f32.gmra.mrb[0].mxu0 %v482
    %v595 = vpop.f32.mrb[0].mxu0
    %v596 = vadd.f32 %v423, %v595
    %v597 = vpop.f32.mrb[0].mxu0
    %598 = vmatprep.mubr.f32.mxu0 0.0
    %599 = vmatmul.mubr.f32.gmra.mrb[0].mxu0 %v485
    %v600 = vpop.f32.mrb[0].mxu0
    %v601 = vadd.f32 %v427, %v600
    %v602 = vpop.f32.mrb[0].mxu0
    %603 = vmatprep.mubr.f32.mxu0 0.0
    %604 = vmatmul.mubr.f32.gmra.mrb[0].mxu0 %v488
    %v605 = vpop.f32.mrb[0].mxu0
    %v606 = vadd.f32 %v431, %v605
    %v607 = vpop.f32.mrb[0].mxu0
    %608 = vmatprep.mubr.f32.mxu0 0.0
    %609 = vmatmul.mubr.f32.gmra.mrb[0].mxu0 %v491
    %v610 = vpop.f32.mrb[0].mxu0
    %v611 = vadd.f32 %v435, %v610
    %v612 = vpop.f32.mrb[0].mxu0
    %613 = vmatprep.mubr.f32.mxu0 0.0
    %614 = vmatmul.mubr.f32.gmra.mrb[0].mxu0 %v494
    %v615 = vpop.f32.mrb[0].mxu0
    %v616 = vpop.f32.mrb[0].mxu0
    %617 = vmatprep.mubr.f32.mxu0 0.0
    %618 = vmatmul.mubr.f32.gmra.mrb[0].mxu0 %v497
    %v619 = vpop.f32.mrb[0].mxu0
    %v620 = vpop.f32.mrb[0].mxu0
    %621 = vmatprep.mubr.f32.mxu0 0.0
    %622 = vmatmul.mubr.f32.gmra.mrb[0].mxu0 %v500
    %v623 = vpop.f32.mrb[0].mxu0
    %v624 = vpop.f32.mrb[0].mxu0
    %625 = vmatprep.mubr.f32.mxu0 0.0
    %626 = vmatmul.mubr.f32.gmra.mrb[0].mxu0 %v503
    %v627 = vpop.f32.mrb[0].mxu0
    %v628 = vpop.f32.mrb[0].mxu0
    %629 = vmatprep.mubr.f32.mxu0 0.0
    %630 = vmatmul.mubr.f32.gmra.mrb[0].mxu0 %v506
    %v631 = vpop.f32.mrb[0].mxu0
    %v632 = vadd.f32 %v451, %v631
    %v633 = vpop.f32.mrb[0].mxu0
    %634 = vmatprep.mubr.f32.mxu0 0.0
    %635 = vmatmul.mubr.f32.gmra.mrb[0].mxu0 %v509
    %v636 = vpop.f32.mrb[0].mxu0
    %v637 = vadd.f32 %v455, %v636
    %v638 = vpop.f32.mrb[0].mxu0
    %639 = vmatprep.mubr.f32.mxu0 0.0
    %640 = vmatmul.mubr.f32.gmra.mrb[0].mxu0 %v512
    %v641 = vpop.f32.mrb[0].mxu0
    %v642 = vadd.f32 %v459, %v641
    %v643 = vpop.f32.mrb[0].mxu0
    %644 = vmatprep.mubr.f32.mxu0 0.0
    %645 = vmatmul.mubr.f32.gmra.mrb[0].mxu0 %v515
    %v646 = vpop.f32.mrb[0].mxu0
    %v647 = vadd.f32 %v463, %v646
    %v648 = vpop.f32.mrb[0].mxu0
    %649 = vmatprep.mubr.f32.mxu0 0.0
    %650 = vmatmul.mubr.f32.gmra.mrb[0].mxu0 %v518
    %v651 = vpop.f32.mrb[0].mxu0
    %v652 = vadd.f32 %v467, %v651
    %v653 = vpop.f32.mrb[0].mxu0
    %654 = vmatprep.mubr.f32.mxu0 0.0
    %655 = vmatmul.mubr.f32.gmra.mrb[0].mxu0 %v521
    %v656 = vpop.f32.mrb[0].mxu0
    %v657 = vadd.f32 %v471, %v656
    %v658 = vpop.f32.mrb[0].mxu0
    %659 = vmatprep.mubr.f32.mxu0 0.0
    %660 = vmatmul.mubr.f32.gmra.mrb[0].mxu0 %v524
    %v661 = vpop.f32.mrb[0].mxu0
    %v662 = vadd.f32 %v475, %v661
    %v663 = vpop.f32.mrb[0].mxu0
    %664 = vmatprep.mubr.f32.mxu0 0.0
    %665 = vmatmul.mubr.f32.gmra.mrb[0].mxu0 %v527
    %v666 = vpop.f32.mrb[0].mxu0
    %v667 = vadd.f32 %v479, %v666
    %v668 = vpop.f32.mrb[0].mxu0
    %669 = vdwg.mxu0
    %v670 = vxor.u32 %v596, 2147483648
    %v671 = vxor.u32 %v601, 2147483648
    %v672 = vxor.u32 %v606, 2147483648
    %v673 = vxor.u32 %v611, 2147483648
    %v674 = vmul.f32 %v670, 1.442695
    %v675 = vpow.pop %v674
    %v676 = vmul.f32 %v671, 1.442695
    %v677 = vpow.pop %v676
    %v678 = vmul.f32 %v672, 1.442695
    %v679 = vpow.pop %v678
    %v680 = vmul.f32 %v673, 1.442695
    %v681 = vpow.pop %v680
    %v682 = vadd.f32 %v675, 1.0
    %v683 = vadd.f32 %v677, 1.0
    %v684 = vadd.f32 %v679, 1.0
    %v685 = vadd.f32 %v681, 1.0
    %v686 = vrcp.pop %v682
    %v687 = vmul.f32 1.0, %v686
    %v688 = vrcp.pop %v683
    %v689 = vmul.f32 1.0, %v688
    %v690 = vrcp.pop %v684
    %v691 = vmul.f32 1.0, %v690
    %v692 = vrcp.pop %v685
    %v693 = vmul.f32 1.0, %v692
    %v694 = vtanh.pop %v632
    %v695 = vtanh.pop %v637
    %v696 = vtanh.pop %v642
    %v697 = vtanh.pop %v647
    %v698 = vxor.u32 %v652, 2147483648
    %v699 = vxor.u32 %v657, 2147483648
    %v700 = vxor.u32 %v662, 2147483648
    %v701 = vxor.u32 %v667, 2147483648
    %v702 = vmul.f32 %v698, 1.442695
    %v703 = vpow.pop %v702
    %v704 = vmul.f32 %v699, 1.442695
    %v705 = vpow.pop %v704
    %v706 = vmul.f32 %v700, 1.442695
    %v707 = vpow.pop %v706
    %v708 = vmul.f32 %v701, 1.442695
    %v709 = vpow.pop %v708
    %v710 = vadd.f32 %v703, 1.0
    %v711 = vadd.f32 %v705, 1.0
    %v712 = vadd.f32 %v707, 1.0
    %v713 = vadd.f32 %v709, 1.0
    %v714 = vrcp.pop %v710
    %v715 = vmul.f32 1.0, %v714
    %v716 = vrcp.pop %v711
    %v717 = vmul.f32 1.0, %v716
    %v718 = vrcp.pop %v712
    %v719 = vmul.f32 1.0, %v718
    %v720 = vrcp.pop %v713
    %v721 = vmul.f32 1.0, %v720
    %v722 = vmul.f32 %v687, %v694
    %v723 = vmul.f32 %v689, %v695
    %v724 = vmul.f32 %v691, %v696
    %v725 = vmul.f32 %v693, %v697
    %v726 = vtanh.pop %v722
    %v727 = vtanh.pop %v723
    %v728 = vtanh.pop %v724
    %v729 = vtanh.pop %v725
    %v730 = vmul.f32 %v715, %v726
    %v731 = vmul.f32 %v717, %v727
    %v732 = vmul.f32 %v719, %v728
    %v733 = vmul.f32 %v721, %v729
    %734 = vset.pattern.permute.xlu0 2
    %735 = vperm.xlu0 %734, %v75
    %v736 = vpop.permute.xlu0 %735
    %738 = vset.pattern.permute.xlu0 2
    %739 = vperm.xlu0 %738, %v76
    %v740 = vpop.permute.xlu0 %739
    %742 = vset.pattern.permute.xlu0 2
    %743 = vperm.xlu0 %742, %v77
    %v744 = vpop.permute.xlu0 %743
    %746 = vset.pattern.permute.xlu0 2
    %747 = vperm.xlu0 %746, %v78
    %v748 = vpop.permute.xlu0 %747
    %750 = vset.pattern.permute.xlu0 2
    %751 = vperm.xlu0 %750, %v79
    %v752 = vpop.permute.xlu0 %751
    %753 = vset.pattern.permute.xlu0 2
    %754 = vperm.xlu0 %753, %v80
    %v755 = vpop.permute.xlu0 %754
    %756 = vset.pattern.permute.xlu0 2
    %757 = vperm.xlu0 %756, %v81
    %v758 = vpop.permute.xlu0 %757
    %759 = vset.pattern.permute.xlu0 2
    %760 = vperm.xlu0 %759, %v82
    %v761 = vpop.permute.xlu0 %760
    %762 = vset.pattern.permute.xlu0 2
    %763 = vperm.xlu0 %762, %v83
    %v764 = vpop.permute.xlu0 %763
    %766 = vset.pattern.permute.xlu0 2
    %767 = vperm.xlu0 %766, %v84
    %v768 = vpop.permute.xlu0 %767
    %770 = vset.pattern.permute.xlu0 2
    %771 = vperm.xlu0 %770, %v85
    %v772 = vpop.permute.xlu0 %771
    %774 = vset.pattern.permute.xlu0 2
    %775 = vperm.xlu0 %774, %v86
    %v776 = vpop.permute.xlu0 %775
    %778 = vset.pattern.permute.xlu0 2
    %779 = vperm.xlu0 %778, %v87
    %v780 = vpop.permute.xlu0 %779
    %782 = vset.pattern.permute.xlu0 2
    %783 = vperm.xlu0 %782, %v88
    %v784 = vpop.permute.xlu0 %783
    %786 = vset.pattern.permute.xlu0 2
    %787 = vperm.xlu0 %786, %v89
    %v788 = vpop.permute.xlu0 %787
    %790 = vset.pattern.permute.xlu0 2
    %791 = vperm.xlu0 %790, %v90
    %v792 = vpop.permute.xlu0 %791
    %v795 = vsel %vm167, %v43, 0
    %v798 = vsel %vm167, %v44, 0
    %v801 = vsel %vm167, %v45, 0
    %v804 = vsel %vm167, %v46, 0
    %v807 = vsel %vm167, %v47, 0
    %v810 = vsel %vm167, %v48, 0
    %v813 = vsel %vm167, %v49, 0
    %v816 = vsel %vm167, %v50, 0
    %v819 = vsel %vm167, %v51, 0
    %v822 = vsel %vm167, %v52, 0
    %v825 = vsel %vm167, %v53, 0
    %v828 = vsel %vm167, %v54, 0
    %v831 = vsel %vm167, %v55, 0
    %v834 = vsel %vm167, %v56, 0
    %v837 = vsel %vm167, %v57, 0
    %v840 = vsel %vm167, %v58, 0
    %842 = vmatprep.subr.mxu0 0.0
    %843 = vmatpush1.msra.mxu0 %v730
    %844 = vmatprep.subr.mxu0 0.0
    %845 = vmatpush1.msra.mxu0 %v731
    %846 = vmatprep.subr.mxu0 0.0
    %847 = vmatpush1.msra.mxu0 %v732
    %848 = vmatprep.subr.mxu0 0.0
    %849 = vmatpush1.msra.mxu0 %v733
    %850 = vmatprep.subr.mxu0 0.0
    %851 = vmatpush1.msra.mxu0 0.0
    %852 = vmatprep.subr.mxu0 0.0
    %853 = vmatpush1.msra.mxu0 0.0
    %854 = vmatprep.subr.mxu0 0.0
    %855 = vmatpush1.msra.mxu0 0.0
    %856 = vmatprep.subr.mxu0 0.0
    %857 = vmatpush1.msra.mxu0 0.0
    %858 = vmatprep.subr.mxu0 0.0
    %859 = vmatpush1.msra.mxu0 0.0
    %860 = vmatprep.subr.mxu0 0.0
    %861 = vmatpush1.msra.mxu0 0.0
    %862 = vmatprep.subr.mxu0 0.0
    %863 = vmatpush1.msra.mxu0 0.0
    %864 = vmatprep.subr.mxu0 0.0
    %865 = vmatpush1.msra.mxu0 0.0
    %866 = vmatprep.subr.mxu0 0.0
    %867 = vmatpush1.msra.mxu0 0.0
    %868 = vmatprep.subr.mxu0 0.0
    %869 = vmatpush1.msra.mxu0 0.0
    %870 = vmatprep.subr.mxu0 0.0
    %871 = vmatpush1.msra.mxu0 0.0
    %872 = vmatprep.subr.mxu0 0.0
    %873 = vmatpush1.msra.mxu0 0.0
    %874 = vmatprep.subr.mxu0 0.0
    %875 = vmatpush1.msra.mxu0 0.0
    %876 = vmatprep.subr.mxu0 0.0
    %877 = vmatpush1.msra.mxu0 0.0
    %878 = vmatprep.subr.mxu0 0.0
    %879 = vmatpush1.msra.mxu0 0.0
    %880 = vmatprep.subr.mxu0 0.0
    %881 = vmatpush1.msra.mxu0 0.0
    %882 = vmatprep.subr.mxu0 0.0
    %883 = vmatpush1.msra.mxu0 0.0
    %884 = vmatprep.subr.mxu0 0.0
    %885 = vmatpush1.msra.mxu0 0.0
    %886 = vmatprep.subr.mxu0 0.0
    %887 = vmatpush1.msra.mxu0 0.0
    %888 = vmatprep.subr.mxu0 0.0
    %889 = vmatpush1.msra.mxu0 0.0
    %890 = vmatprep.subr.mxu0 0.0
    %891 = vmatpush1.msra.mxu0 0.0
    %892 = vmatprep.subr.mxu0 0.0
    %893 = vmatpush1.msra.mxu0 0.0
    %894 = vmatprep.subr.mxu0 0.0
    %895 = vmatpush1.msra.mxu0 0.0
    %896 = vmatprep.subr.mxu0 0.0
    %897 = vmatpush1.msra.mxu0 0.0
    %898 = vmatprep.subr.mxu0 0.0
    %899 = vmatpush1.msra.mxu0 0.0
    %900 = vmatprep.subr.mxu0 0.0
    %901 = vmatpush1.msra.mxu0 0.0
    %902 = vmatprep.subr.mxu0 0.0
    %903 = vmatpush1.msra.mxu0 0.0
    %904 = vmatprep.subr.mxu0 0.0
    %905 = vmatpush1.msra.mxu0 0.0
    %906 = vmatprep.mubr.f32.mxu0 0.0
    %907 = vmatmul.mubr.f32.gmra.mrb[0].mxu0 %v795
    %v908 = vpop.f32.mrb[0].mxu0
    %v909 = vadd.f32 %v736, %v908
    %v910 = vpop.f32.mrb[0].mxu0
    %911 = vmatprep.mubr.f32.mxu0 0.0
    %912 = vmatmul.mubr.f32.gmra.mrb[0].mxu0 %v798
    %v913 = vpop.f32.mrb[0].mxu0
    %v914 = vadd.f32 %v740, %v913
    %v915 = vpop.f32.mrb[0].mxu0
    %916 = vmatprep.mubr.f32.mxu0 0.0
    %917 = vmatmul.mubr.f32.gmra.mrb[0].mxu0 %v801
    %v918 = vpop.f32.mrb[0].mxu0
    %v919 = vadd.f32 %v744, %v918
    %v920 = vpop.f32.mrb[0].mxu0
    %921 = vmatprep.mubr.f32.mxu0 0.0
    %922 = vmatmul.mubr.f32.gmra.mrb[0].mxu0 %v804
    %v923 = vpop.f32.mrb[0].mxu0
    %v924 = vadd.f32 %v748, %v923
    %v925 = vpop.f32.mrb[0].mxu0
    %926 = vmatprep.mubr.f32.mxu0 0.0
    %927 = vmatmul.mubr.f32.gmra.mrb[0].mxu0 %v807
    %v928 = vpop.f32.mrb[0].mxu0
    %v929 = vpop.f32.mrb[0].mxu0
    %930 = vmatprep.mubr.f32.mxu0 0.0
    %931 = vmatmul.mubr.f32.gmra.mrb[0].mxu0 %v810
    %v932 = vpop.f32.mrb[0].mxu0
    %v933 = vpop.f32.mrb[0].mxu0
    %934 = vmatprep.mubr.f32.mxu0 0.0
    %935 = vmatmul.mubr.f32.gmra.mrb[0].mxu0 %v813
    %v936 = vpop.f32.mrb[0].mxu0
    %v937 = vpop.f32.mrb[0].mxu0
    %938 = vmatprep.mubr.f32.mxu0 0.0
    %939 = vmatmul.mubr.f32.gmra.mrb[0].mxu0 %v816
    %v940 = vpop.f32.mrb[0].mxu0
    %v941 = vpop.f32.mrb[0].mxu0
    %942 = vmatprep.mubr.f32.mxu0 0.0
    %943 = vmatmul.mubr.f32.gmra.mrb[0].mxu0 %v819
    %v944 = vpop.f32.mrb[0].mxu0
    %v945 = vadd.f32 %v764, %v944
    %v946 = vpop.f32.mrb[0].mxu0
    %947 = vmatprep.mubr.f32.mxu0 0.0
    %948 = vmatmul.mubr.f32.gmra.mrb[0].mxu0 %v822
    %v949 = vpop.f32.mrb[0].mxu0
    %v950 = vadd.f32 %v768, %v949
    %v951 = vpop.f32.mrb[0].mxu0
    %952 = vmatprep.mubr.f32.mxu0 0.0
    %953 = vmatmul.mubr.f32.gmra.mrb[0].mxu0 %v825
    %v954 = vpop.f32.mrb[0].mxu0
    %v955 = vadd.f32 %v772, %v954
    %v956 = vpop.f32.mrb[0].mxu0
    %957 = vmatprep.mubr.f32.mxu0 0.0
    %958 = vmatmul.mubr.f32.gmra.mrb[0].mxu0 %v828
    %v959 = vpop.f32.mrb[0].mxu0
    %v960 = vadd.f32 %v776, %v959
    %v961 = vpop.f32.mrb[0].mxu0
    %962 = vmatprep.mubr.f32.mxu0 0.0
    %963 = vmatmul.mubr.f32.gmra.mrb[0].mxu0 %v831
    %v964 = vpop.f32.mrb[0].mxu0
    %v965 = vadd.f32 %v780, %v964
    %v966 = vpop.f32.mrb[0].mxu0
    %967 = vmatprep.mubr.f32.mxu0 0.0
    %968 = vmatmul.mubr.f32.gmra.mrb[0].mxu0 %v834
    %v969 = vpop.f32.mrb[0].mxu0
    %v970 = vadd.f32 %v784, %v969
    %v971 = vpop.f32.mrb[0].mxu0
    %972 = vmatprep.mubr.f32.mxu0 0.0
    %973 = vmatmul.mubr.f32.gmra.mrb[0].mxu0 %v837
    %v974 = vpop.f32.mrb[0].mxu0
    %v975 = vadd.f32 %v788, %v974
    %v976 = vpop.f32.mrb[0].mxu0
    %977 = vmatprep.mubr.f32.mxu0 0.0
    %978 = vmatmul.mubr.f32.gmra.mrb[0].mxu0 %v840
    %v979 = vpop.f32.mrb[0].mxu0
    %v980 = vadd.f32 %v792, %v979
    %v981 = vpop.f32.mrb[0].mxu0
    %982 = vdwg.mxu0
    %v983 = vxor.u32 %v909, 2147483648
    %v984 = vxor.u32 %v914, 2147483648
    %v985 = vxor.u32 %v919, 2147483648
    %v986 = vxor.u32 %v924, 2147483648
    %v987 = vmul.f32 %v983, 1.442695
    %v988 = vpow.pop %v987
    %v989 = vmul.f32 %v984, 1.442695
    %v990 = vpow.pop %v989
    %v991 = vmul.f32 %v985, 1.442695
    %v992 = vpow.pop %v991
    %v993 = vmul.f32 %v986, 1.442695
    %v994 = vpow.pop %v993
    %v995 = vadd.f32 %v988, 1.0
    %v996 = vadd.f32 %v990, 1.0
    %v997 = vadd.f32 %v992, 1.0
    %v998 = vadd.f32 %v994, 1.0
    %v999 = vrcp.pop %v995
    %v1000 = vmul.f32 1.0, %v999
    %v1001 = vrcp.pop %v996
    %v1002 = vmul.f32 1.0, %v1001
    %v1003 = vrcp.pop %v997
    %v1004 = vmul.f32 1.0, %v1003
    %v1005 = vrcp.pop %v998
    %v1006 = vmul.f32 1.0, %v1005
    %v1007 = vtanh.pop %v945
    %v1008 = vtanh.pop %v950
    %v1009 = vtanh.pop %v955
    %v1010 = vtanh.pop %v960
    %v1011 = vxor.u32 %v965, 2147483648
    %v1012 = vxor.u32 %v970, 2147483648
    %v1013 = vxor.u32 %v975, 2147483648
    %v1014 = vxor.u32 %v980, 2147483648
    %v1015 = vmul.f32 %v1011, 1.442695
    %v1016 = vpow.pop %v1015
    %v1017 = vmul.f32 %v1012, 1.442695
    %v1018 = vpow.pop %v1017
    %v1019 = vmul.f32 %v1013, 1.442695
    %v1020 = vpow.pop %v1019
    %v1021 = vmul.f32 %v1014, 1.442695
    %v1022 = vpow.pop %v1021
    %v1023 = vadd.f32 %v1016, 1.0
    %v1024 = vadd.f32 %v1018, 1.0
    %v1025 = vadd.f32 %v1020, 1.0
    %v1026 = vadd.f32 %v1022, 1.0
    %v1027 = vrcp.pop %v1023
    %v1028 = vmul.f32 1.0, %v1027
    %v1029 = vrcp.pop %v1024
    %v1030 = vmul.f32 1.0, %v1029
    %v1031 = vrcp.pop %v1025
    %v1032 = vmul.f32 1.0, %v1031
    %v1033 = vrcp.pop %v1026
    %v1034 = vmul.f32 1.0, %v1033
    %v1035 = vmul.f32 %v1000, %v1007
    %v1036 = vmul.f32 %v1002, %v1008
    %v1037 = vmul.f32 %v1004, %v1009
    %v1038 = vmul.f32 %v1006, %v1010
    %v1039 = vtanh.pop %v1035
    %v1040 = vtanh.pop %v1036
    %v1041 = vtanh.pop %v1037
    %v1042 = vtanh.pop %v1038
    %v1043 = vmul.f32 %v1028, %v1039
    %v1044 = vmul.f32 %v1030, %v1040
    %v1045 = vmul.f32 %v1032, %v1041
    %v1046 = vmul.f32 %v1034, %v1042
    %v1047 = vld [vmem:[%s2] sm:$0xff]
    %v1048 = vld [vmem:[%s2 + $0x8] sm:$0xff]
    %v1049 = vld [vmem:[%s2 + $0x10] sm:$0xff]
    %v1050 = vld [vmem:[%s2 + $0x18] sm:$0xff]
    %v1051 = vld [vmem:[%s2 + $0x20] sm:$0xff]
    %v1052 = vld [vmem:[%s2 + $0x28] sm:$0xff]
    %v1053 = vld [vmem:[%s2 + $0x30] sm:$0xff]
    %v1054 = vld [vmem:[%s2 + $0x38] sm:$0xff]
    %v1055 = vld [vmem:[%s2 + $0x40] sm:$0xff]
    %v1056 = vld [vmem:[%s2 + $0x48] sm:$0xff]
    %v1057 = vld [vmem:[%s2 + $0x50] sm:$0xff]
    %v1058 = vld [vmem:[%s2 + $0x58] sm:$0xff]
    %v1059 = vld [vmem:[%s2 + $0x60] sm:$0xff]
    %v1060 = vld [vmem:[%s2 + $0x68] sm:$0xff]
    %v1061 = vld [vmem:[%s2 + $0x70] sm:$0xff]
    %v1062 = vld [vmem:[%s2 + $0x78] sm:$0xff]
    %1063 = vset.pattern.permute.xlu0 3
    %1064 = vperm.xlu0 %1063, %v75
    %v1065 = vpop.permute.xlu0 %1064
    %1067 = vset.pattern.permute.xlu0 3
    %1068 = vperm.xlu0 %1067, %v76
    %v1069 = vpop.permute.xlu0 %1068
    %1071 = vset.pattern.permute.xlu0 3
    %1072 = vperm.xlu0 %1071, %v77
    %v1073 = vpop.permute.xlu0 %1072
    %1075 = vset.pattern.permute.xlu0 3
    %1076 = vperm.xlu0 %1075, %v78
    %v1077 = vpop.permute.xlu0 %1076
    %1079 = vset.pattern.permute.xlu0 3
    %1080 = vperm.xlu0 %1079, %v79
    %v1081 = vpop.permute.xlu0 %1080
    %1083 = vset.pattern.permute.xlu0 3
    %1084 = vperm.xlu0 %1083, %v80
    %v1085 = vpop.permute.xlu0 %1084
    %1087 = vset.pattern.permute.xlu0 3
    %1088 = vperm.xlu0 %1087, %v81
    %v1089 = vpop.permute.xlu0 %1088
    %1091 = vset.pattern.permute.xlu0 3
    %1092 = vperm.xlu0 %1091, %v82
    %v1093 = vpop.permute.xlu0 %1092
    %1095 = vset.pattern.permute.xlu0 3
    %1096 = vperm.xlu0 %1095, %v83
    %v1097 = vpop.permute.xlu0 %1096
    %1099 = vset.pattern.permute.xlu0 3
    %1100 = vperm.xlu0 %1099, %v84
    %v1101 = vpop.permute.xlu0 %1100
    %1103 = vset.pattern.permute.xlu0 3
    %1104 = vperm.xlu0 %1103, %v85
    %v1105 = vpop.permute.xlu0 %1104
    %1107 = vset.pattern.permute.xlu0 3
    %1108 = vperm.xlu0 %1107, %v86
    %v1109 = vpop.permute.xlu0 %1108
    %1111 = vset.pattern.permute.xlu0 3
    %1112 = vperm.xlu0 %1111, %v87
    %v1113 = vpop.permute.xlu0 %1112
    %1115 = vset.pattern.permute.xlu0 3
    %1116 = vperm.xlu0 %1115, %v88
    %v1117 = vpop.permute.xlu0 %1116
    %1119 = vset.pattern.permute.xlu0 3
    %1120 = vperm.xlu0 %1119, %v89
    %v1121 = vpop.permute.xlu0 %1120
    %1123 = vset.pattern.permute.xlu0 3
    %1124 = vperm.xlu0 %1123, %v90
    %v1125 = vpop.permute.xlu0 %1124
    %vm1127 = vcmask 523264
    %v1129 = vsel %vm1127, %v1047, 0
    %v1132 = vsel %vm1127, %v1048, 0
    %v1135 = vsel %vm1127, %v1049, 0
    %v1138 = vsel %vm1127, %v1050, 0
    %v1141 = vsel %vm1127, %v1051, 0
    %v1144 = vsel %vm1127, %v1052, 0
    %v1147 = vsel %vm1127, %v1053, 0
    %v1150 = vsel %vm1127, %v1054, 0
    %v1153 = vsel %vm1127, %v1055, 0
    %v1156 = vsel %vm1127, %v1056, 0
    %v1159 = vsel %vm1127, %v1057, 0
    %v1162 = vsel %vm1127, %v1058, 0
    %v1165 = vsel %vm1127, %v1059, 0
    %v1168 = vsel %vm1127, %v1060, 0
    %v1171 = vsel %vm1127, %v1061, 0
    %v1174 = vsel %vm1127, %v1062, 0
    %1176 = vmatprep.subr.mxu0 0.0
    %1177 = vmatpush1.msra.mxu0 %v1043
    %1178 = vmatprep.subr.mxu0 0.0
    %1179 = vmatpush1.msra.mxu0 %v1044
    %1180 = vmatprep.subr.mxu0 0.0
    %1181 = vmatpush1.msra.mxu0 %v1045
    %1182 = vmatprep.subr.mxu0 0.0
    %1183 = vmatpush1.msra.mxu0 %v1046
    %1184 = vmatprep.subr.mxu0 0.0
    %1185 = vmatpush1.msra.mxu0 %v417
    %1186 = vmatprep.subr.mxu0 0.0
    %1187 = vmatpush1.msra.mxu0 %v418
    %1188 = vmatprep.subr.mxu0 0.0
    %1189 = vmatpush1.msra.mxu0 %v419
    %1190 = vmatprep.subr.mxu0 0.0
    %1191 = vmatpush1.msra.mxu0 %v420
    %1192 = vmatprep.subr.mxu0 0.0
    %1193 = vmatpush1.msra.mxu0 0.0
    %1194 = vmatprep.subr.mxu0 0.0
    %1195 = vmatpush1.msra.mxu0 0.0
    %1196 = vmatprep.subr.mxu0 0.0
    %1197 = vmatpush1.msra.mxu0 0.0
    %1198 = vmatprep.subr.mxu0 0.0
    %1199 = vmatpush1.msra.mxu0 0.0
    %1200 = vmatprep.subr.mxu0 0.0
    %1201 = vmatpush1.msra.mxu0 0.0
    %1202 = vmatprep.subr.mxu0 0.0
    %1203 = vmatpush1.msra.mxu0 0.0
    %1204 = vmatprep.subr.mxu0 0.0
    %1205 = vmatpush1.msra.mxu0 0.0
    %1206 = vmatprep.subr.mxu0 0.0
    %1207 = vmatpush1.msra.mxu0 0.0
    %1208 = vmatprep.subr.mxu0 0.0
    %1209 = vmatpush1.msra.mxu0 0.0
    %1210 = vmatprep.subr.mxu0 0.0
    %1211 = vmatpush1.msra.mxu0 0.0
    %1212 = vmatprep.subr.mxu0 0.0
    %1213 = vmatpush1.msra.mxu0 0.0
    %1214 = vmatprep.subr.mxu0 0.0
    %1215 = vmatpush1.msra.mxu0 0.0
    %1216 = vmatprep.subr.mxu0 0.0
    %1217 = vmatpush1.msra.mxu0 0.0
    %1218 = vmatprep.subr.mxu0 0.0
    %1219 = vmatpush1.msra.mxu0 0.0
    %1220 = vmatprep.subr.mxu0 0.0
    %1221 = vmatpush1.msra.mxu0 0.0
    %1222 = vmatprep.subr.mxu0 0.0
    %1223 = vmatpush1.msra.mxu0 0.0
    %1224 = vmatprep.subr.mxu0 0.0
    %1225 = vmatpush1.msra.mxu0 0.0
    %1226 = vmatprep.subr.mxu0 0.0
    %1227 = vmatpush1.msra.mxu0 0.0
    %1228 = vmatprep.subr.mxu0 0.0
    %1229 = vmatpush1.msra.mxu0 0.0
    %1230 = vmatprep.subr.mxu0 0.0
    %1231 = vmatpush1.msra.mxu0 0.0
    %1232 = vmatprep.subr.mxu0 0.0
    %1233 = vmatpush1.msra.mxu0 0.0
    %1234 = vmatprep.subr.mxu0 0.0
    %1235 = vmatpush1.msra.mxu0 0.0
    %1236 = vmatprep.subr.mxu0 0.0
    %1237 = vmatpush1.msra.mxu0 0.0
    %1238 = vmatprep.subr.mxu0 0.0
    %1239 = vmatpush1.msra.mxu0 0.0
    %1240 = vmatprep.mubr.f32.mxu0 0.0
    %1241 = vmatmul.mubr.f32.gmra.mrb[0].mxu0 %v1129
    %v1242 = vpop.f32.mrb[0].mxu0
    %v1243 = vadd.f32 %v1065, %v1242
    %v1244 = vpop.f32.mrb[0].mxu0
    %1245 = vmatprep.mubr.f32.mxu0 0.0
    %1246 = vmatmul.mubr.f32.gmra.mrb[0].mxu0 %v1132
    %v1247 = vpop.f32.mrb[0].mxu0
    %v1248 = vadd.f32 %v1069, %v1247
    %v1249 = vpop.f32.mrb[0].mxu0
    %1250 = vmatprep.mubr.f32.mxu0 0.0
    %1251 = vmatmul.mubr.f32.gmra.mrb[0].mxu0 %v1135
    %v1252 = vpop.f32.mrb[0].mxu0
    %v1253 = vadd.f32 %v1073, %v1252
    %v1254 = vpop.f32.mrb[0].mxu0
    %1255 = vmatprep.mubr.f32.mxu0 0.0
    %1256 = vmatmul.mubr.f32.gmra.mrb[0].mxu0 %v1138
    %v1257 = vpop.f32.mrb[0].mxu0
    %v1258 = vadd.f32 %v1077, %v1257
    %v1259 = vpop.f32.mrb[0].mxu0
    %1260 = vmatprep.mubr.f32.mxu0 0.0
    %1261 = vmatmul.mubr.f32.gmra.mrb[0].mxu0 %v1141
    %v1262 = vpop.f32.mrb[0].mxu0
    %v1263 = vadd.f32 %v1081, %v1262
    %v1264 = vpop.f32.mrb[0].mxu0
    %1265 = vmatprep.mubr.f32.mxu0 0.0
    %1266 = vmatmul.mubr.f32.gmra.mrb[0].mxu0 %v1144
    %v1267 = vpop.f32.mrb[0].mxu0
    %v1268 = vadd.f32 %v1085, %v1267
    %v1269 = vpop.f32.mrb[0].mxu0
    %1270 = vmatprep.mubr.f32.mxu0 0.0
    %1271 = vmatmul.mubr.f32.gmra.mrb[0].mxu0 %v1147
    %v1272 = vpop.f32.mrb[0].mxu0
    %v1273 = vadd.f32 %v1089, %v1272
    %v1274 = vpop.f32.mrb[0].mxu0
    %1275 = vmatprep.mubr.f32.mxu0 0.0
    %1276 = vmatmul.mubr.f32.gmra.mrb[0].mxu0 %v1150
    %v1277 = vpop.f32.mrb[0].mxu0
    %v1278 = vadd.f32 %v1093, %v1277
    %v1279 = vpop.f32.mrb[0].mxu0
    %1280 = vmatprep.mubr.f32.mxu0 0.0
    %1281 = vmatmul.mubr.f32.gmra.mrb[0].mxu0 %v1153
    %v1282 = vpop.f32.mrb[0].mxu0
    %v1283 = vadd.f32 %v1097, %v1282
    %v1284 = vpop.f32.mrb[0].mxu0
    %1285 = vmatprep.mubr.f32.mxu0 0.0
    %1286 = vmatmul.mubr.f32.gmra.mrb[0].mxu0 %v1156
    %v1287 = vpop.f32.mrb[0].mxu0
    %v1288 = vadd.f32 %v1101, %v1287
    %v1289 = vpop.f32.mrb[0].mxu0
    %1290 = vmatprep.mubr.f32.mxu0 0.0
    %1291 = vmatmul.mubr.f32.gmra.mrb[0].mxu0 %v1159
    %v1292 = vpop.f32.mrb[0].mxu0
    %v1293 = vadd.f32 %v1105, %v1292
    %v1294 = vpop.f32.mrb[0].mxu0
    %1295 = vmatprep.mubr.f32.mxu0 0.0
    %1296 = vmatmul.mubr.f32.gmra.mrb[0].mxu0 %v1162
    %v1297 = vpop.f32.mrb[0].mxu0
    %v1298 = vadd.f32 %v1109, %v1297
    %v1299 = vpop.f32.mrb[0].mxu0
    %1300 = vmatprep.mubr.f32.mxu0 0.0
    %1301 = vmatmul.mubr.f32.gmra.mrb[0].mxu0 %v1165
    %v1302 = vpop.f32.mrb[0].mxu0
    %v1303 = vadd.f32 %v1113, %v1302
    %v1304 = vpop.f32.mrb[0].mxu0
    %1305 = vmatprep.mubr.f32.mxu0 0.0
    %1306 = vmatmul.mubr.f32.gmra.mrb[0].mxu0 %v1168
    %v1307 = vpop.f32.mrb[0].mxu0
    %v1308 = vadd.f32 %v1117, %v1307
    %v1309 = vpop.f32.mrb[0].mxu0
    %1310 = vmatprep.mubr.f32.mxu0 0.0
    %1311 = vmatmul.mubr.f32.gmra.mrb[0].mxu0 %v1171
    %v1312 = vpop.f32.mrb[0].mxu0
    %v1313 = vadd.f32 %v1121, %v1312
    %v1314 = vpop.f32.mrb[0].mxu0
    %1315 = vmatprep.mubr.f32.mxu0 0.0
    %1316 = vmatmul.mubr.f32.gmra.mrb[0].mxu0 %v1174
    %v1317 = vpop.f32.mrb[0].mxu0
    %v1318 = vadd.f32 %v1125, %v1317
    %v1319 = vpop.f32.mrb[0].mxu0
    %1320 = vdwg.mxu0
    %v1321 = vxor.u32 %v1243, 2147483648
    %v1322 = vxor.u32 %v1248, 2147483648
    %v1323 = vxor.u32 %v1253, 2147483648
    %v1324 = vxor.u32 %v1258, 2147483648
    %v1325 = vmul.f32 %v1321, 1.442695
    %v1326 = vpow.pop %v1325
    %v1327 = vmul.f32 %v1322, 1.442695
    %v1328 = vpow.pop %v1327
    %v1329 = vmul.f32 %v1323, 1.442695
    %v1330 = vpow.pop %v1329
    %v1331 = vmul.f32 %v1324, 1.442695
    %v1332 = vpow.pop %v1331
    %v1333 = vadd.f32 %v1326, 1.0
    %v1334 = vadd.f32 %v1328, 1.0
    %v1335 = vadd.f32 %v1330, 1.0
    %v1336 = vadd.f32 %v1332, 1.0
    %v1337 = vrcp.pop %v1333
    %v1338 = vmul.f32 1.0, %v1337
    %v1339 = vrcp.pop %v1334
    %v1340 = vmul.f32 1.0, %v1339
    %v1341 = vrcp.pop %v1335
    %v1342 = vmul.f32 1.0, %v1341
    %v1343 = vrcp.pop %v1336
    %v1344 = vmul.f32 1.0, %v1343
    %v1345 = vxor.u32 %v1263, 2147483648
    %v1346 = vxor.u32 %v1268, 2147483648
    %v1347 = vxor.u32 %v1273, 2147483648
    %v1348 = vxor.u32 %v1278, 2147483648
    %v1349 = vmul.f32 %v1345, 1.442695
    %v1350 = vpow.pop %v1349
    %v1351 = vmul.f32 %v1346, 1.442695
    %v1352 = vpow.pop %v1351
    %v1353 = vmul.f32 %v1347, 1.442695
    %v1354 = vpow.pop %v1353
    %v1355 = vmul.f32 %v1348, 1.442695
    %v1356 = vpow.pop %v1355
    %v1357 = vadd.f32 %v1350, 1.0
    %v1358 = vadd.f32 %v1352, 1.0
    %v1359 = vadd.f32 %v1354, 1.0
    %v1360 = vadd.f32 %v1356, 1.0
    %v1361 = vrcp.pop %v1357
    %v1362 = vmul.f32 1.0, %v1361
    %v1363 = vrcp.pop %v1358
    %v1364 = vmul.f32 1.0, %v1363
    %v1365 = vrcp.pop %v1359
    %v1366 = vmul.f32 1.0, %v1365
    %v1367 = vrcp.pop %v1360
    %v1368 = vmul.f32 1.0, %v1367
    %v1369 = vtanh.pop %v1283
    %v1370 = vtanh.pop %v1288
    %v1371 = vtanh.pop %v1293
    %v1372 = vtanh.pop %v1298
    %v1373 = vxor.u32 %v1303, 2147483648
    %v1374 = vxor.u32 %v1308, 2147483648
    %v1375 = vxor.u32 %v1313, 2147483648
    %v1376 = vxor.u32 %v1318, 2147483648
    %v1377 = vmul.f32 %v1373, 1.442695
    %v1378 = vpow.pop %v1377
    %v1379 = vmul.f32 %v1374, 1.442695
    %v1380 = vpow.pop %v1379
    %v1381 = vmul.f32 %v1375, 1.442695
    %v1382 = vpow.pop %v1381
    %v1383 = vmul.f32 %v1376, 1.442695
    %v1384 = vpow.pop %v1383
    %v1385 = vadd.f32 %v1378, 1.0
    %v1386 = vadd.f32 %v1380, 1.0
    %v1387 = vadd.f32 %v1382, 1.0
    %v1388 = vadd.f32 %v1384, 1.0
    %v1389 = vrcp.pop %v1385
    %v1390 = vmul.f32 1.0, %v1389
    %v1391 = vrcp.pop %v1386
    %v1392 = vmul.f32 1.0, %v1391
    %v1393 = vrcp.pop %v1387
    %v1394 = vmul.f32 1.0, %v1393
    %v1395 = vrcp.pop %v1388
    %v1396 = vmul.f32 1.0, %v1395
    %v1397 = vmul.f32 %v1362, %v409
    %v1398 = vmul.f32 %v1364, %v410
    %v1399 = vmul.f32 %v1366, %v411
    %v1400 = vmul.f32 %v1368, %v412
    %v1401 = vmul.f32 %v1338, %v1369
    %v1402 = vmul.f32 %v1340, %v1370
    %v1403 = vmul.f32 %v1342, %v1371
    %v1404 = vmul.f32 %v1344, %v1372
    %v1405 = vadd.f32 %v1397, %v1401
    %v1406 = vadd.f32 %v1398, %v1402
    %v1407 = vadd.f32 %v1399, %v1403
    %v1408 = vadd.f32 %v1400, %v1404
    %v1409 = vtanh.pop %v1405
    %v1410 = vtanh.pop %v1406
    %v1411 = vtanh.pop %v1407
    %v1412 = vtanh.pop %v1408
    %v1413 = vmul.f32 %v1390, %v1409
    %v1414 = vmul.f32 %v1392, %v1410
    %v1415 = vmul.f32 %v1394, %v1411
    %v1416 = vmul.f32 %v1396, %v1412
    %s1417 = scalar_lea.vmem %s2, 128
    %v1418 = vld [vmem:[%s1417] sm:$0xff]
    %v1419 = vld [vmem:[%s1417 + $0x8] sm:$0xff]
    %v1420 = vld [vmem:[%s1417 + $0x10] sm:$0xff]
    %v1421 = vld [vmem:[%s1417 + $0x18] sm:$0xff]
    %v1422 = vld [vmem:[%s1417 + $0x20] sm:$0xff]
    %v1423 = vld [vmem:[%s1417 + $0x28] sm:$0xff]
    %v1424 = vld [vmem:[%s1417 + $0x30] sm:$0xff]
    %v1425 = vld [vmem:[%s1417 + $0x38] sm:$0xff]
    %v1426 = vld [vmem:[%s1417 + $0x40] sm:$0xff]
    %v1427 = vld [vmem:[%s1417 + $0x48] sm:$0xff]
    %v1428 = vld [vmem:[%s1417 + $0x50] sm:$0xff]
    %v1429 = vld [vmem:[%s1417 + $0x58] sm:$0xff]
    %v1430 = vld [vmem:[%s1417 + $0x60] sm:$0xff]
    %v1431 = vld [vmem:[%s1417 + $0x68] sm:$0xff]
    %v1432 = vld [vmem:[%s1417 + $0x70] sm:$0xff]
    %v1433 = vld [vmem:[%s1417 + $0x78] sm:$0xff]
    %1434 = vset.pattern.permute.xlu0 4
    %1435 = vperm.xlu0 %1434, %v75
    %v1436 = vpop.permute.xlu0 %1435
    %1438 = vset.pattern.permute.xlu0 4
    %1439 = vperm.xlu0 %1438, %v76
    %v1440 = vpop.permute.xlu0 %1439
    %1442 = vset.pattern.permute.xlu0 4
    %1443 = vperm.xlu0 %1442, %v77
    %v1444 = vpop.permute.xlu0 %1443
    %1446 = vset.pattern.permute.xlu0 4
    %1447 = vperm.xlu0 %1446, %v78
    %v1448 = vpop.permute.xlu0 %1447
    %1450 = vset.pattern.permute.xlu0 4
    %1451 = vperm.xlu0 %1450, %v79
    %v1452 = vpop.permute.xlu0 %1451
    %1454 = vset.pattern.permute.xlu0 4
    %1455 = vperm.xlu0 %1454, %v80
    %v1456 = vpop.permute.xlu0 %1455
    %1458 = vset.pattern.permute.xlu0 4
    %1459 = vperm.xlu0 %1458, %v81
    %v1460 = vpop.permute.xlu0 %1459
    %1462 = vset.pattern.permute.xlu0 4
    %1463 = vperm.xlu0 %1462, %v82
    %v1464 = vpop.permute.xlu0 %1463
    %1466 = vset.pattern.permute.xlu0 4
    %1467 = vperm.xlu0 %1466, %v83
    %v1468 = vpop.permute.xlu0 %1467
    %1470 = vset.pattern.permute.xlu0 4
    %1471 = vperm.xlu0 %1470, %v84
    %v1472 = vpop.permute.xlu0 %1471
    %1474 = vset.pattern.permute.xlu0 4
    %1475 = vperm.xlu0 %1474, %v85
    %v1476 = vpop.permute.xlu0 %1475
    %1478 = vset.pattern.permute.xlu0 4
    %1479 = vperm.xlu0 %1478, %v86
    %v1480 = vpop.permute.xlu0 %1479
    %1482 = vset.pattern.permute.xlu0 4
    %1483 = vperm.xlu0 %1482, %v87
    %v1484 = vpop.permute.xlu0 %1483
    %1486 = vset.pattern.permute.xlu0 4
    %1487 = vperm.xlu0 %1486, %v88
    %v1488 = vpop.permute.xlu0 %1487
    %1490 = vset.pattern.permute.xlu0 4
    %1491 = vperm.xlu0 %1490, %v89
    %v1492 = vpop.permute.xlu0 %1491
    %1494 = vset.pattern.permute.xlu0 4
    %1495 = vperm.xlu0 %1494, %v90
    %v1496 = vpop.permute.xlu0 %1495
    %v1499 = vsel %vm1127, %v1418, 0
    %v1502 = vsel %vm1127, %v1419, 0
    %v1505 = vsel %vm1127, %v1420, 0
    %v1508 = vsel %vm1127, %v1421, 0
    %v1511 = vsel %vm1127, %v1422, 0
    %v1514 = vsel %vm1127, %v1423, 0
    %v1517 = vsel %vm1127, %v1424, 0
    %v1520 = vsel %vm1127, %v1425, 0
    %v1523 = vsel %vm1127, %v1426, 0
    %v1526 = vsel %vm1127, %v1427, 0
    %v1529 = vsel %vm1127, %v1428, 0
    %v1532 = vsel %vm1127, %v1429, 0
    %v1535 = vsel %vm1127, %v1430, 0
    %v1538 = vsel %vm1127, %v1431, 0
    %v1541 = vsel %vm1127, %v1432, 0
    %v1544 = vsel %vm1127, %v1433, 0
    %1546 = vmatprep.subr.mxu0 0.0
    %1547 = vmatpush1.msra.mxu0 %v1413
    %1548 = vmatprep.subr.mxu0 0.0
    %1549 = vmatpush1.msra.mxu0 %v1414
    %1550 = vmatprep.subr.mxu0 0.0
    %1551 = vmatpush1.msra.mxu0 %v1415
    %1552 = vmatprep.subr.mxu0 0.0
    %1553 = vmatpush1.msra.mxu0 %v1416
    %1554 = vmatprep.subr.mxu0 0.0
    %1555 = vmatpush1.msra.mxu0 %v730
    %1556 = vmatprep.subr.mxu0 0.0
    %1557 = vmatpush1.msra.mxu0 %v731
    %1558 = vmatprep.subr.mxu0 0.0
    %1559 = vmatpush1.msra.mxu0 %v732
    %1560 = vmatprep.subr.mxu0 0.0
    %1561 = vmatpush1.msra.mxu0 %v733
    %1562 = vmatprep.subr.mxu0 0.0
    %1563 = vmatpush1.msra.mxu0 0.0
    %1564 = vmatprep.subr.mxu0 0.0
    %1565 = vmatpush1.msra.mxu0 0.0
    %1566 = vmatprep.subr.mxu0 0.0
    %1567 = vmatpush1.msra.mxu0 0.0
    %1568 = vmatprep.subr.mxu0 0.0
    %1569 = vmatpush1.msra.mxu0 0.0
    %1570 = vmatprep.subr.mxu0 0.0
    %1571 = vmatpush1.msra.mxu0 0.0
    %1572 = vmatprep.subr.mxu0 0.0
    %1573 = vmatpush1.msra.mxu0 0.0
    %1574 = vmatprep.subr.mxu0 0.0
    %1575 = vmatpush1.msra.mxu0 0.0
    %1576 = vmatprep.subr.mxu0 0.0
    %1577 = vmatpush1.msra.mxu0 0.0
    %1578 = vmatprep.subr.mxu0 0.0
    %1579 = vmatpush1.msra.mxu0 0.0
    %1580 = vmatprep.subr.mxu0 0.0
    %1581 = vmatpush1.msra.mxu0 0.0
    %1582 = vmatprep.subr.mxu0 0.0
    %1583 = vmatpush1.msra.mxu0 0.0
    %1584 = vmatprep.subr.mxu0 0.0
    %1585 = vmatpush1.msra.mxu0 0.0
    %1586 = vmatprep.subr.mxu0 0.0
    %1587 = vmatpush1.msra.mxu0 0.0
    %1588 = vmatprep.subr.mxu0 0.0
    %1589 = vmatpush1.msra.mxu0 0.0
    %1590 = vmatprep.subr.mxu0 0.0
    %1591 = vmatpush1.msra.mxu0 0.0
    %1592 = vmatprep.subr.mxu0 0.0
    %1593 = vmatpush1.msra.mxu0 0.0
    %1594 = vmatprep.subr.mxu0 0.0
    %1595 = vmatpush1.msra.mxu0 0.0
    %1596 = vmatprep.subr.mxu0 0.0
    %1597 = vmatpush1.msra.mxu0 0.0
    %1598 = vmatprep.subr.mxu0 0.0
    %1599 = vmatpush1.msra.mxu0 0.0
    %1600 = vmatprep.subr.mxu0 0.0
    %1601 = vmatpush1.msra.mxu0 0.0
    %1602 = vmatprep.subr.mxu0 0.0
    %1603 = vmatpush1.msra.mxu0 0.0
    %1604 = vmatprep.subr.mxu0 0.0
    %1605 = vmatpush1.msra.mxu0 0.0
    %1606 = vmatprep.subr.mxu0 0.0
    %1607 = vmatpush1.msra.mxu0 0.0
    %1608 = vmatprep.subr.mxu0 0.0
    %1609 = vmatpush1.msra.mxu0 0.0
    %1610 = vmatprep.mubr.f32.mxu0 0.0
    %1611 = vmatmul.mubr.f32.gmra.mrb[0].mxu0 %v1499
    %v1612 = vpop.f32.mrb[0].mxu0
    %v1613 = vadd.f32 %v1436, %v1612
    %v1614 = vpop.f32.mrb[0].mxu0
    %1615 = vmatprep.mubr.f32.mxu0 0.0
    %1616 = vmatmul.mubr.f32.gmra.mrb[0].mxu0 %v1502
    %v1617 = vpop.f32.mrb[0].mxu0
    %v1618 = vadd.f32 %v1440, %v1617
    %v1619 = vpop.f32.mrb[0].mxu0
    %1620 = vmatprep.mubr.f32.mxu0 0.0
    %1621 = vmatmul.mubr.f32.gmra.mrb[0].mxu0 %v1505
    %v1622 = vpop.f32.mrb[0].mxu0
    %v1623 = vadd.f32 %v1444, %v1622
    %v1624 = vpop.f32.mrb[0].mxu0
    %1625 = vmatprep.mubr.f32.mxu0 0.0
    %1626 = vmatmul.mubr.f32.gmra.mrb[0].mxu0 %v1508
    %v1627 = vpop.f32.mrb[0].mxu0
    %v1628 = vadd.f32 %v1448, %v1627
    %v1629 = vpop.f32.mrb[0].mxu0
    %1630 = vmatprep.mubr.f32.mxu0 0.0
    %1631 = vmatmul.mubr.f32.gmra.mrb[0].mxu0 %v1511
    %v1632 = vpop.f32.mrb[0].mxu0
    %v1633 = vadd.f32 %v1452, %v1632
    %v1634 = vpop.f32.mrb[0].mxu0
    %1635 = vmatprep.mubr.f32.mxu0 0.0
    %1636 = vmatmul.mubr.f32.gmra.mrb[0].mxu0 %v1514
    %v1637 = vpop.f32.mrb[0].mxu0
    %v1638 = vadd.f32 %v1456, %v1637
    %v1639 = vpop.f32.mrb[0].mxu0
    %1640 = vmatprep.mubr.f32.mxu0 0.0
    %1641 = vmatmul.mubr.f32.gmra.mrb[0].mxu0 %v1517
    %v1642 = vpop.f32.mrb[0].mxu0
    %v1643 = vadd.f32 %v1460, %v1642
    %v1644 = vpop.f32.mrb[0].mxu0
    %1645 = vmatprep.mubr.f32.mxu0 0.0
    %1646 = vmatmul.mubr.f32.gmra.mrb[0].mxu0 %v1520
    %v1647 = vpop.f32.mrb[0].mxu0
    %v1648 = vadd.f32 %v1464, %v1647
    %v1649 = vpop.f32.mrb[0].mxu0
    %1650 = vmatprep.mubr.f32.mxu0 0.0
    %1651 = vmatmul.mubr.f32.gmra.mrb[0].mxu0 %v1523
    %v1652 = vpop.f32.mrb[0].mxu0
    %v1653 = vadd.f32 %v1468, %v1652
    %v1654 = vpop.f32.mrb[0].mxu0
    %1655 = vmatprep.mubr.f32.mxu0 0.0
    %1656 = vmatmul.mubr.f32.gmra.mrb[0].mxu0 %v1526
    %v1657 = vpop.f32.mrb[0].mxu0
    %v1658 = vadd.f32 %v1472, %v1657
    %v1659 = vpop.f32.mrb[0].mxu0
    %1660 = vmatprep.mubr.f32.mxu0 0.0
    %1661 = vmatmul.mubr.f32.gmra.mrb[0].mxu0 %v1529
    %v1662 = vpop.f32.mrb[0].mxu0
    %v1663 = vadd.f32 %v1476, %v1662
    %v1664 = vpop.f32.mrb[0].mxu0
    %1665 = vmatprep.mubr.f32.mxu0 0.0
    %1666 = vmatmul.mubr.f32.gmra.mrb[0].mxu0 %v1532
    %v1667 = vpop.f32.mrb[0].mxu0
    %v1668 = vadd.f32 %v1480, %v1667
    %v1669 = vpop.f32.mrb[0].mxu0
    %1670 = vmatprep.mubr.f32.mxu0 0.0
    %1671 = vmatmul.mubr.f32.gmra.mrb[0].mxu0 %v1535
    %v1672 = vpop.f32.mrb[0].mxu0
    %v1673 = vadd.f32 %v1484, %v1672
    %v1674 = vpop.f32.mrb[0].mxu0
    %1675 = vmatprep.mubr.f32.mxu0 0.0
    %1676 = vmatmul.mubr.f32.gmra.mrb[0].mxu0 %v1538
    %v1677 = vpop.f32.mrb[0].mxu0
    %v1678 = vadd.f32 %v1488, %v1677
    %v1679 = vpop.f32.mrb[0].mxu0
    %1680 = vmatprep.mubr.f32.mxu0 0.0
    %1681 = vmatmul.mubr.f32.gmra.mrb[0].mxu0 %v1541
    %v1682 = vpop.f32.mrb[0].mxu0
    %v1683 = vadd.f32 %v1492, %v1682
    %v1684 = vpop.f32.mrb[0].mxu0
    %1685 = vmatprep.mubr.f32.mxu0 0.0
    %1686 = vmatmul.mubr.f32.gmra.mrb[0].mxu0 %v1544
    %v1687 = vpop.f32.mrb[0].mxu0
    %v1688 = vadd.f32 %v1496, %v1687
    %v1689 = vpop.f32.mrb[0].mxu0
    %1690 = vdwg.mxu0
    %v1691 = vxor.u32 %v1613, 2147483648
    %v1692 = vxor.u32 %v1618, 2147483648
    %v1693 = vxor.u32 %v1623, 2147483648
    %v1694 = vxor.u32 %v1628, 2147483648
    %v1695 = vmul.f32 %v1691, 1.442695
    %v1696 = vpow.pop %v1695
    %v1697 = vmul.f32 %v1692, 1.442695
    %v1698 = vpow.pop %v1697
    %v1699 = vmul.f32 %v1693, 1.442695
    %v1700 = vpow.pop %v1699
    %v1701 = vmul.f32 %v1694, 1.442695
    %v1702 = vpow.pop %v1701
    %v1703 = vadd.f32 %v1696, 1.0
    %v1704 = vadd.f32 %v1698, 1.0
    %v1705 = vadd.f32 %v1700, 1.0
    %v1706 = vadd.f32 %v1702, 1.0
    %v1707 = vrcp.pop %v1703
    %v1708 = vmul.f32 1.0, %v1707
    %v1709 = vrcp.pop %v1704
    %v1710 = vmul.f32 1.0, %v1709
    %v1711 = vrcp.pop %v1705
    %v1712 = vmul.f32 1.0, %v1711
    %v1713 = vrcp.pop %v1706
    %v1714 = vmul.f32 1.0, %v1713
    %v1715 = vxor.u32 %v1633, 2147483648
    %v1716 = vxor.u32 %v1638, 2147483648
    %v1717 = vxor.u32 %v1643, 2147483648
    %v1718 = vxor.u32 %v1648, 2147483648
    %v1719 = vmul.f32 %v1715, 1.442695
    %v1720 = vpow.pop %v1719
    %v1721 = vmul.f32 %v1716, 1.442695
    %v1722 = vpow.pop %v1721
    %v1723 = vmul.f32 %v1717, 1.442695
    %v1724 = vpow.pop %v1723
    %v1725 = vmul.f32 %v1718, 1.442695
    %v1726 = vpow.pop %v1725
    %v1727 = vadd.f32 %v1720, 1.0
    %v1728 = vadd.f32 %v1722, 1.0
    %v1729 = vadd.f32 %v1724, 1.0
    %v1730 = vadd.f32 %v1726, 1.0
    %v1731 = vrcp.pop %v1727
    %v1732 = vmul.f32 1.0, %v1731
    %v1733 = vrcp.pop %v1728
    %v1734 = vmul.f32 1.0, %v1733
    %v1735 = vrcp.pop %v1729
    %v1736 = vmul.f32 1.0, %v1735
    %v1737 = vrcp.pop %v1730
    %v1738 = vmul.f32 1.0, %v1737
    %v1739 = vtanh.pop %v1653
    %v1740 = vtanh.pop %v1658
    %v1741 = vtanh.pop %v1663
    %v1742 = vtanh.pop %v1668
    %v1743 = vxor.u32 %v1673, 2147483648
    %v1744 = vxor.u32 %v1678, 2147483648
    %v1745 = vxor.u32 %v1683, 2147483648
    %v1746 = vxor.u32 %v1688, 2147483648
    %v1747 = vmul.f32 %v1743, 1.442695
    %v1748 = vpow.pop %v1747
    %v1749 = vmul.f32 %v1744, 1.442695
    %v1750 = vpow.pop %v1749
    %v1751 = vmul.f32 %v1745, 1.442695
    %v1752 = vpow.pop %v1751
    %v1753 = vmul.f32 %v1746, 1.442695
    %v1754 = vpow.pop %v1753
    %v1755 = vadd.f32 %v1748, 1.0
    %v1756 = vadd.f32 %v1750, 1.0
    %v1757 = vadd.f32 %v1752, 1.0
    %v1758 = vadd.f32 %v1754, 1.0
    %v1759 = vrcp.pop %v1755
    %v1760 = vmul.f32 1.0, %v1759
    %v1761 = vrcp.pop %v1756
    %v1762 = vmul.f32 1.0, %v1761
    %v1763 = vrcp.pop %v1757
    %v1764 = vmul.f32 1.0, %v1763
    %v1765 = vrcp.pop %v1758
    %v1766 = vmul.f32 1.0, %v1765
    %v1767 = vmul.f32 %v1732, %v722
    %v1768 = vmul.f32 %v1734, %v723
    %v1769 = vmul.f32 %v1736, %v724
    %v1770 = vmul.f32 %v1738, %v725
    %v1771 = vmul.f32 %v1708, %v1739
    %v1772 = vmul.f32 %v1710, %v1740
    %v1773 = vmul.f32 %v1712, %v1741
    %v1774 = vmul.f32 %v1714, %v1742
    %v1775 = vadd.f32 %v1767, %v1771
    %v1776 = vadd.f32 %v1768, %v1772
    %v1777 = vadd.f32 %v1769, %v1773
    %v1778 = vadd.f32 %v1770, %v1774
    %v1779 = vtanh.pop %v1775
    %v1780 = vtanh.pop %v1776
    %v1781 = vtanh.pop %v1777
    %v1782 = vtanh.pop %v1778
    %v1783 = vmul.f32 %v1760, %v1779
    %v1784 = vmul.f32 %v1762, %v1780
    %v1785 = vmul.f32 %v1764, %v1781
    %v1786 = vmul.f32 %v1766, %v1782
    %s1787 = scalar_lea.vmem %s2, 256
    %v1788 = vld [vmem:[%s1787] sm:$0xff]
    %v1789 = vld [vmem:[%s1787 + $0x8] sm:$0xff]
    %v1790 = vld [vmem:[%s1787 + $0x10] sm:$0xff]
    %v1791 = vld [vmem:[%s1787 + $0x18] sm:$0xff]
    %v1792 = vld [vmem:[%s1787 + $0x20] sm:$0xff]
    %v1793 = vld [vmem:[%s1787 + $0x28] sm:$0xff]
    %v1794 = vld [vmem:[%s1787 + $0x30] sm:$0xff]
    %v1795 = vld [vmem:[%s1787 + $0x38] sm:$0xff]
    %v1796 = vld [vmem:[%s1787 + $0x40] sm:$0xff]
    %v1797 = vld [vmem:[%s1787 + $0x48] sm:$0xff]
    %v1798 = vld [vmem:[%s1787 + $0x50] sm:$0xff]
    %v1799 = vld [vmem:[%s1787 + $0x58] sm:$0xff]
    %v1800 = vld [vmem:[%s1787 + $0x60] sm:$0xff]
    %v1801 = vld [vmem:[%s1787 + $0x68] sm:$0xff]
    %v1802 = vld [vmem:[%s1787 + $0x70] sm:$0xff]
    %v1803 = vld [vmem:[%s1787 + $0x78] sm:$0xff]
    %1804 = vset.pattern.permute.xlu0 5
    %1805 = vperm.xlu0 %1804, %v75
    %v1806 = vpop.permute.xlu0 %1805
    %1808 = vset.pattern.permute.xlu0 5
    %1809 = vperm.xlu0 %1808, %v76
    %v1810 = vpop.permute.xlu0 %1809
    %1812 = vset.pattern.permute.xlu0 5
    %1813 = vperm.xlu0 %1812, %v77
    %v1814 = vpop.permute.xlu0 %1813
    %1816 = vset.pattern.permute.xlu0 5
    %1817 = vperm.xlu0 %1816, %v78
    %v1818 = vpop.permute.xlu0 %1817
    %1820 = vset.pattern.permute.xlu0 5
    %1821 = vperm.xlu0 %1820, %v79
    %v1822 = vpop.permute.xlu0 %1821
    %1824 = vset.pattern.permute.xlu0 5
    %1825 = vperm.xlu0 %1824, %v80
    %v1826 = vpop.permute.xlu0 %1825
    %1828 = vset.pattern.permute.xlu0 5
    %1829 = vperm.xlu0 %1828, %v81
    %v1830 = vpop.permute.xlu0 %1829
    %1832 = vset.pattern.permute.xlu0 5
    %1833 = vperm.xlu0 %1832, %v82
    %v1834 = vpop.permute.xlu0 %1833
    %1836 = vset.pattern.permute.xlu0 5
    %1837 = vperm.xlu0 %1836, %v83
    %v1838 = vpop.permute.xlu0 %1837
    %1840 = vset.pattern.permute.xlu0 5
    %1841 = vperm.xlu0 %1840, %v84
    %v1842 = vpop.permute.xlu0 %1841
    %1844 = vset.pattern.permute.xlu0 5
    %1845 = vperm.xlu0 %1844, %v85
    %v1846 = vpop.permute.xlu0 %1845
    %1848 = vset.pattern.permute.xlu0 5
    %1849 = vperm.xlu0 %1848, %v86
    %v1850 = vpop.permute.xlu0 %1849
    %1852 = vset.pattern.permute.xlu0 5
    %1853 = vperm.xlu0 %1852, %v87
    %v1854 = vpop.permute.xlu0 %1853
    %1856 = vset.pattern.permute.xlu0 5
    %1857 = vperm.xlu0 %1856, %v88
    %v1858 = vpop.permute.xlu0 %1857
    %1860 = vset.pattern.permute.xlu0 5
    %1861 = vperm.xlu0 %1860, %v89
    %v1862 = vpop.permute.xlu0 %1861
    %1864 = vset.pattern.permute.xlu0 5
    %1865 = vperm.xlu0 %1864, %v90
    %v1866 = vpop.permute.xlu0 %1865
    %v1869 = vsel %vm1127, %v1788, 0
    %v1872 = vsel %vm1127, %v1789, 0
    %v1875 = vsel %vm1127, %v1790, 0
    %v1878 = vsel %vm1127, %v1791, 0
    %v1881 = vsel %vm1127, %v1792, 0
    %v1884 = vsel %vm1127, %v1793, 0
    %v1887 = vsel %vm1127, %v1794, 0
    %v1890 = vsel %vm1127, %v1795, 0
    %v1893 = vsel %vm1127, %v1796, 0
    %v1896 = vsel %vm1127, %v1797, 0
    %v1899 = vsel %vm1127, %v1798, 0
    %v1902 = vsel %vm1127, %v1799, 0
    %v1905 = vsel %vm1127, %v1800, 0
    %v1908 = vsel %vm1127, %v1801, 0
    %v1911 = vsel %vm1127, %v1802, 0
    %v1914 = vsel %vm1127, %v1803, 0
    %1916 = vmatprep.subr.mxu0 0.0
    %1917 = vmatpush1.msra.mxu0 %v1783
    %1918 = vmatprep.subr.mxu0 0.0
    %1919 = vmatpush1.msra.mxu0 %v1784
    %1920 = vmatprep.subr.mxu0 0.0
    %1921 = vmatpush1.msra.mxu0 %v1785
    %1922 = vmatprep.subr.mxu0 0.0
    %1923 = vmatpush1.msra.mxu0 %v1786
    %1924 = vmatprep.subr.mxu0 0.0
    %1925 = vmatpush1.msra.mxu0 %v1043
    %1926 = vmatprep.subr.mxu0 0.0
    %1927 = vmatpush1.msra.mxu0 %v1044
    %1928 = vmatprep.subr.mxu0 0.0
    %1929 = vmatpush1.msra.mxu0 %v1045
    %1930 = vmatprep.subr.mxu0 0.0
    %1931 = vmatpush1.msra.mxu0 %v1046
    %1932 = vmatprep.subr.mxu0 0.0
    %1933 = vmatpush1.msra.mxu0 0.0
    %1934 = vmatprep.subr.mxu0 0.0
    %1935 = vmatpush1.msra.mxu0 0.0
    %1936 = vmatprep.subr.mxu0 0.0
    %1937 = vmatpush1.msra.mxu0 0.0
    %1938 = vmatprep.subr.mxu0 0.0
    %1939 = vmatpush1.msra.mxu0 0.0
    %1940 = vmatprep.subr.mxu0 0.0
    %1941 = vmatpush1.msra.mxu0 0.0
    %1942 = vmatprep.subr.mxu0 0.0
    %1943 = vmatpush1.msra.mxu0 0.0
    %1944 = vmatprep.subr.mxu0 0.0
    %1945 = vmatpush1.msra.mxu0 0.0
    %1946 = vmatprep.subr.mxu0 0.0
    %1947 = vmatpush1.msra.mxu0 0.0
    %1948 = vmatprep.subr.mxu0 0.0
    %1949 = vmatpush1.msra.mxu0 0.0
    %1950 = vmatprep.subr.mxu0 0.0
    %1951 = vmatpush1.msra.mxu0 0.0
    %1952 = vmatprep.subr.mxu0 0.0
    %1953 = vmatpush1.msra.mxu0 0.0
    %1954 = vmatprep.subr.mxu0 0.0
    %1955 = vmatpush1.msra.mxu0 0.0
    %1956 = vmatprep.subr.mxu0 0.0
    %1957 = vmatpush1.msra.mxu0 0.0
    %1958 = vmatprep.subr.mxu0 0.0
    %1959 = vmatpush1.msra.mxu0 0.0
    %1960 = vmatprep.subr.mxu0 0.0
    %1961 = vmatpush1.msra.mxu0 0.0
    %1962 = vmatprep.subr.mxu0 0.0
    %1963 = vmatpush1.msra.mxu0 0.0
    %1964 = vmatprep.subr.mxu0 0.0
    %1965 = vmatpush1.msra.mxu0 0.0
    %1966 = vmatprep.subr.mxu0 0.0
    %1967 = vmatpush1.msra.mxu0 0.0
    %1968 = vmatprep.subr.mxu0 0.0
    %1969 = vmatpush1.msra.mxu0 0.0
    %1970 = vmatprep.subr.mxu0 0.0
    %1971 = vmatpush1.msra.mxu0 0.0
    %1972 = vmatprep.subr.mxu0 0.0
    %1973 = vmatpush1.msra.mxu0 0.0
    %1974 = vmatprep.subr.mxu0 0.0
    %1975 = vmatpush1.msra.mxu0 0.0
    %1976 = vmatprep.subr.mxu0 0.0
    %1977 = vmatpush1.msra.mxu0 0.0
    %1978 = vmatprep.subr.mxu0 0.0
    %1979 = vmatpush1.msra.mxu0 0.0
    %1980 = vmatprep.mubr.f32.mxu0 0.0
    %1981 = vmatmul.mubr.f32.gmra.mrb[0].mxu0 %v1869
    %v1982 = vpop.f32.mrb[0].mxu0
    %v1983 = vadd.f32 %v1806, %v1982
    %v1984 = vpop.f32.mrb[0].mxu0
    %1985 = vmatprep.mubr.f32.mxu0 0.0
    %1986 = vmatmul.mubr.f32.gmra.mrb[0].mxu0 %v1872
    %v1987 = vpop.f32.mrb[0].mxu0
    %v1988 = vadd.f32 %v1810, %v1987
    %v1989 = vpop.f32.mrb[0].mxu0
    %1990 = vmatprep.mubr.f32.mxu0 0.0
    %1991 = vmatmul.mubr.f32.gmra.mrb[0].mxu0 %v1875
    %v1992 = vpop.f32.mrb[0].mxu0
    %v1993 = vadd.f32 %v1814, %v1992
    %v1994 = vpop.f32.mrb[0].mxu0
    %1995 = vmatprep.mubr.f32.mxu0 0.0
    %1996 = vmatmul.mubr.f32.gmra.mrb[0].mxu0 %v1878
    %v1997 = vpop.f32.mrb[0].mxu0
    %v1998 = vadd.f32 %v1818, %v1997
    %v1999 = vpop.f32.mrb[0].mxu0
    %2000 = vmatprep.mubr.f32.mxu0 0.0
    %2001 = vmatmul.mubr.f32.gmra.mrb[0].mxu0 %v1881
    %v2002 = vpop.f32.mrb[0].mxu0
    %v2003 = vadd.f32 %v1822, %v2002
    %v2004 = vpop.f32.mrb[0].mxu0
    %2005 = vmatprep.mubr.f32.mxu0 0.0
    %2006 = vmatmul.mubr.f32.gmra.mrb[0].mxu0 %v1884
    %v2007 = vpop.f32.mrb[0].mxu0
    %v2008 = vadd.f32 %v1826, %v2007
    %v2009 = vpop.f32.mrb[0].mxu0
    %2010 = vmatprep.mubr.f32.mxu0 0.0
    %2011 = vmatmul.mubr.f32.gmra.mrb[0].mxu0 %v1887
    %v2012 = vpop.f32.mrb[0].mxu0
    %v2013 = vadd.f32 %v1830, %v2012
    %v2014 = vpop.f32.mrb[0].mxu0
    %2015 = vmatprep.mubr.f32.mxu0 0.0
    %2016 = vmatmul.mubr.f32.gmra.mrb[0].mxu0 %v1890
    %v2017 = vpop.f32.mrb[0].mxu0
    %v2018 = vadd.f32 %v1834, %v2017
    %v2019 = vpop.f32.mrb[0].mxu0
    %2020 = vmatprep.mubr.f32.mxu0 0.0
    %2021 = vmatmul.mubr.f32.gmra.mrb[0].mxu0 %v1893
    %v2022 = vpop.f32.mrb[0].mxu0
    %v2023 = vadd.f32 %v1838, %v2022
    %v2024 = vpop.f32.mrb[0].mxu0
    %2025 = vmatprep.mubr.f32.mxu0 0.0
    %2026 = vmatmul.mubr.f32.gmra.mrb[0].mxu0 %v1896
    %v2027 = vpop.f32.mrb[0].mxu0
    %v2028 = vadd.f32 %v1842, %v2027
    %v2029 = vpop.f32.mrb[0].mxu0
    %2030 = vmatprep.mubr.f32.mxu0 0.0
    %2031 = vmatmul.mubr.f32.gmra.mrb[0].mxu0 %v1899
    %v2032 = vpop.f32.mrb[0].mxu0
    %v2033 = vadd.f32 %v1846, %v2032
    %v2034 = vpop.f32.mrb[0].mxu0
    %2035 = vmatprep.mubr.f32.mxu0 0.0
    %2036 = vmatmul.mubr.f32.gmra.mrb[0].mxu0 %v1902
    %v2037 = vpop.f32.mrb[0].mxu0
    %v2038 = vadd.f32 %v1850, %v2037
    %v2039 = vpop.f32.mrb[0].mxu0
    %2040 = vmatprep.mubr.f32.mxu0 0.0
    %2041 = vmatmul.mubr.f32.gmra.mrb[0].mxu0 %v1905
    %v2042 = vpop.f32.mrb[0].mxu0
    %v2043 = vadd.f32 %v1854, %v2042
    %v2044 = vpop.f32.mrb[0].mxu0
    %2045 = vmatprep.mubr.f32.mxu0 0.0
    %2046 = vmatmul.mubr.f32.gmra.mrb[0].mxu0 %v1908
    %v2047 = vpop.f32.mrb[0].mxu0
    %v2048 = vadd.f32 %v1858, %v2047
    %v2049 = vpop.f32.mrb[0].mxu0
    %2050 = vmatprep.mubr.f32.mxu0 0.0
    %2051 = vmatmul.mubr.f32.gmra.mrb[0].mxu0 %v1911
    %v2052 = vpop.f32.mrb[0].mxu0
    %v2053 = vadd.f32 %v1862, %v2052
    %v2054 = vpop.f32.mrb[0].mxu0
    %2055 = vmatprep.mubr.f32.mxu0 0.0
    %2056 = vmatmul.mubr.f32.gmra.mrb[0].mxu0 %v1914
    %v2057 = vpop.f32.mrb[0].mxu0
    %v2058 = vadd.f32 %v1866, %v2057
    %v2059 = vpop.f32.mrb[0].mxu0
    %2060 = vdwg.mxu0
    %v2061 = vxor.u32 %v1983, 2147483648
    %v2062 = vxor.u32 %v1988, 2147483648
    %v2063 = vxor.u32 %v1993, 2147483648
    %v2064 = vxor.u32 %v1998, 2147483648
    %v2065 = vmul.f32 %v2061, 1.442695
    %v2066 = vpow.pop %v2065
    %v2067 = vmul.f32 %v2062, 1.442695
    %v2068 = vpow.pop %v2067
    %v2069 = vmul.f32 %v2063, 1.442695
    %v2070 = vpow.pop %v2069
    %v2071 = vmul.f32 %v2064, 1.442695
    %v2072 = vpow.pop %v2071
    %v2073 = vadd.f32 %v2066, 1.0
    %v2074 = vadd.f32 %v2068, 1.0
    %v2075 = vadd.f32 %v2070, 1.0
    %v2076 = vadd.f32 %v2072, 1.0
    %v2077 = vrcp.pop %v2073
    %v2078 = vmul.f32 1.0, %v2077
    %v2079 = vrcp.pop %v2074
    %v2080 = vmul.f32 1.0, %v2079
    %v2081 = vrcp.pop %v2075
    %v2082 = vmul.f32 1.0, %v2081
    %v2083 = vrcp.pop %v2076
    %v2084 = vmul.f32 1.0, %v2083
    %v2085 = vxor.u32 %v2003, 2147483648
    %v2086 = vxor.u32 %v2008, 2147483648
    %v2087 = vxor.u32 %v2013, 2147483648
    %v2088 = vxor.u32 %v2018, 2147483648
    %v2089 = vmul.f32 %v2085, 1.442695
    %v2090 = vpow.pop %v2089
    %v2091 = vmul.f32 %v2086, 1.442695
    %v2092 = vpow.pop %v2091
    %v2093 = vmul.f32 %v2087, 1.442695
    %v2094 = vpow.pop %v2093
    %v2095 = vmul.f32 %v2088, 1.442695
    %v2096 = vpow.pop %v2095
    %v2097 = vadd.f32 %v2090, 1.0
    %v2098 = vadd.f32 %v2092, 1.0
    %v2099 = vadd.f32 %v2094, 1.0
    %v2100 = vadd.f32 %v2096, 1.0
    %v2101 = vrcp.pop %v2097
    %v2102 = vmul.f32 1.0, %v2101
    %v2103 = vrcp.pop %v2098
    %v2104 = vmul.f32 1.0, %v2103
    %v2105 = vrcp.pop %v2099
    %v2106 = vmul.f32 1.0, %v2105
    %v2107 = vrcp.pop %v2100
    %v2108 = vmul.f32 1.0, %v2107
    %v2109 = vtanh.pop %v2023
    %v2110 = vtanh.pop %v2028
    %v2111 = vtanh.pop %v2033
    %v2112 = vtanh.pop %v2038
    %v2113 = vxor.u32 %v2043, 2147483648
    %v2114 = vxor.u32 %v2048, 2147483648
    %v2115 = vxor.u32 %v2053, 2147483648
    %v2116 = vxor.u32 %v2058, 2147483648
    %v2117 = vmul.f32 %v2113, 1.442695
    %v2118 = vpow.pop %v2117
    %v2119 = vmul.f32 %v2114, 1.442695
    %v2120 = vpow.pop %v2119
    %v2121 = vmul.f32 %v2115, 1.442695
    %v2122 = vpow.pop %v2121
    %v2123 = vmul.f32 %v2116, 1.442695
    %v2124 = vpow.pop %v2123
    %v2125 = vadd.f32 %v2118, 1.0
    %v2126 = vadd.f32 %v2120, 1.0
    %v2127 = vadd.f32 %v2122, 1.0
    %v2128 = vadd.f32 %v2124, 1.0
    %v2129 = vrcp.pop %v2125
    %v2130 = vmul.f32 1.0, %v2129
    %v2131 = vrcp.pop %v2126
    %v2132 = vmul.f32 1.0, %v2131
    %v2133 = vrcp.pop %v2127
    %v2134 = vmul.f32 1.0, %v2133
    %v2135 = vrcp.pop %v2128
    %v2136 = vmul.f32 1.0, %v2135
    %v2137 = vmul.f32 %v2102, %v1035
    %v2138 = vmul.f32 %v2104, %v1036
    %v2139 = vmul.f32 %v2106, %v1037
    %v2140 = vmul.f32 %v2108, %v1038
    %v2141 = vmul.f32 %v2078, %v2109
    %v2142 = vmul.f32 %v2080, %v2110
    %v2143 = vmul.f32 %v2082, %v2111
    %v2144 = vmul.f32 %v2084, %v2112
    %v2145 = vadd.f32 %v2137, %v2141
    %v2146 = vadd.f32 %v2138, %v2142
    %v2147 = vadd.f32 %v2139, %v2143
    %v2148 = vadd.f32 %v2140, %v2144
    %v2149 = vtanh.pop %v2145
    %v2150 = vtanh.pop %v2146
    %v2151 = vtanh.pop %v2147
    %v2152 = vtanh.pop %v2148
    %v2153 = vmul.f32 %v2130, %v2149
    %v2154 = vmul.f32 %v2132, %v2150
    %v2155 = vmul.f32 %v2134, %v2151
    %v2156 = vmul.f32 %v2136, %v2152
    %v2157 = vld [vmem:[%s4] sm:$0xff]
    %v2158 = vld [vmem:[%s4 + $0x8] sm:$0xff]
    %v2159 = vld [vmem:[%s4 + $0x10] sm:$0xff]
    %v2160 = vld [vmem:[%s4 + $0x18] sm:$0xff]
    %v2161 = vld [vmem:[%s4 + $0x20] sm:$0x1]
    %2163 = vset.pattern.permute.xlu0 0
    %2164 = vperm.xlu0 %2163, %v2157
    %v2165 = vpop.permute.xlu0 %2164
    %2168 = vset.pattern.permute.xlu0 0
    %2169 = vperm.xlu0 %2168, %v2158
    %v2170 = vpop.permute.xlu0 %2169
    %2173 = vset.pattern.permute.xlu0 0
    %2174 = vperm.xlu0 %2173, %v2159
    %v2175 = vpop.permute.xlu0 %2174
    %2178 = vset.pattern.permute.xlu0 0
    %2179 = vperm.xlu0 %2178, %v2160
    %v2180 = vpop.permute.xlu0 %2179
    %v2182 = vmul.f32 %v2153, %v2165
    %v2183 = vmul.f32 %v2154, %v2170
    %v2184 = vmul.f32 %v2155, %v2175
    %v2185 = vmul.f32 %v2156, %v2180
    %v2186 = vadd.f32 %v2182, %v2183
    %v2187 = vadd.f32 %v2186, %v2184
    %v2188 = vadd.f32 %v2187, %v2185
    %v2189 = vrot.slane %v2188, 4
    %v2190 = vadd.f32 %v2188, %v2189
    %v2191 = vrot.slane %v2190, 2
    %v2192 = vadd.f32 %v2190, %v2191
    %v2193 = vrot.slane %v2192, 1
    %v2194 = vadd.f32 %v2192, %v2193
    %2196 = vset.pattern.permute.xlu0 0
    %2197 = vperm.xlu0 %2196, %v2161
    %v2198 = vpop.permute.xlu0 %2197
    %v2200 = vadd.f32 %v2194, %v2198
    %2201 = vst [vmem:[#allocation2] sm:$0x1] %v2200
    // Predicated region
    $region22: #{tpu_custom_call.1} parent=1 // pred_check
      _
    $region23: #{tpu_custom_call.1} parent=1 // pred_check_branch
      %2203 = sbr.rel (0) target = $region25
    $region24: #{tpu_custom_call.1} parent=1 // pred_region
      %s2205 = ssub.s32 16, 16
      %2206 = vsyncadd [#allocation3], %s2205
      %s2208 = sshll.u32 [#allocation2], 4
      %s2209 = int_to_ptr.vmem [resolvable:$true] %s2208
      %2211 = dma.vmem_to_hbm [thread:$0]  %s2209, 16, %s5, [#allocation3]
    $region25: #{tpu_custom_call.1} parent=1 // pred_fallthru
      _
    // Predicated region
    $region26: #{tpu_custom_call.1} parent=1 // pred_check
      _
    $region27: #{tpu_custom_call.1} parent=1 // pred_check_branch
      %2213 = sbr.rel (0) target = $region29
    $region28: #{tpu_custom_call.1} parent=1 // pred_region
      %2214 = dma.done [#allocation3], 16
    $region29: #{tpu_custom_call.1} parent=1 // pred_fallthru
      _
    %2215 = vsyncpa [#allocation3], 1

</llo_original>
